<compile_context>
chip_gen: v6e
topology: v6e:2x2x1
jax: 0.10.0
libtpu: 0.0.40
codegen_flags: <defaults>
</compile_context>

<pallas_src>
import functools
import math

import numpy as np
import jax
import jax.numpy as jnp
from jax import lax
from jax.experimental import pallas as pl
from jax.experimental.pallas import tpu as pltpu

RSI_WINDOW = 14
EMA_SPANS = (3, 6, 12, 24)
EPS = 1e-8
IN_EPS = 1e-5          # F.instance_norm default eps
NUM_FEATURES = 25


@functools.lru_cache(maxsize=None)
def _build_constants(s_pad: int):
    """Host-side constants (cached per padded sequence length)."""
    idx = np.arange(s_pad)
    # cumsum operator:  (x @ C)[b, t] = sum_{s <= t} x[b, s]
    C = (idx[:, None] <= idx[None, :]).astype(np.float32)

    pows = np.empty((len(EMA_SPANS), s_pad), np.float64)
    scale = np.empty((len(EMA_SPANS), s_pad), np.float64)
    for i, span in enumerate(EMA_SPANS):
        ar = 1.0 - 2.0 / (span + 1.0)
        p = np.power(ar, idx.astype(np.float64))
        pows[i] = p
        scale[i] = 1.0 / np.cumsum(p)

    ang = 2.0 * math.pi * (idx % 24) / 24.0
    hours = np.stack([np.sin(ang), np.cos(ang)])

    return (jnp.asarray(C),
            jnp.asarray(pows, dtype=jnp.float32),
            jnp.asarray(scale, dtype=jnp.float32),
            jnp.asarray(hours, dtype=jnp.float32))


def _pick_tb(b: int) -> int:
    """Largest batch tile <= 8 dividing B, preferring >= 2 grid steps (megacore)."""
    upper = min(8, max(b // 2, 1))
    for tb in range(upper, 0, -1):
        if b % tb == 0:
            return tb
    return 1


def _feature_kernel(x_ref, c_ref, pows_ref, scale_ref, hours_ref, out_ref, *, seq_len):
    x = x_ref[...]                               # (TB, 5, S_pad) f32
    open_ = x[:, 0, :]
    high = x[:, 1, :]
    low = x[:, 2, :]
    close = x[:, 3, :]
    volume = x[:, 4, :]
    tb, s_pad = close.shape

    ti = lax.broadcasted_iota(jnp.int32, (1, s_pad), 1)          # lane index
    valid = ti < seq_len                                         # true-sequence mask
    inv_n = 1.0 / float(seq_len)

    def lag(v, k):
        # v[:, t-k] for t >= k, 0 otherwise (zero-filled backward shift).
        if k >= seq_len:
            return jnp.zeros_like(v)
        return jnp.where(ti >= k, pltpu.roll(v, k, 1), 0.0)

    def lag_diff(v, k):
        # v[:, t] - v[:, t-k] for t >= k, 0 otherwise (reference zero-initializes).
        if k >= seq_len:
            return jnp.zeros_like(v)
        return jnp.where(ti >= k, v - pltpu.roll(v, k, 1), 0.0)

    log_close = jnp.log(close + EPS)
    returns = lag_diff(log_close, 1)
    momentum_3 = lag_diff(log_close, 3)
    momentum_6 = lag_diff(log_close, 6)
    deltas = lag_diff(close, 1)                  # deltas[:, 0] == 0

    gain = jnp.maximum(deltas, 0.0)
    loss = jnp.maximum(-deltas, 0.0)
    mult = jnp.where(deltas > 0, 1.0, jnp.where(deltas < 0, -1.0, 0.0))

    # ---- one batched cumsum matmul on the MXU -----------------------------------
    p = pows_ref[...]                            # (4, S_pad)
    sc = scale_ref[...]                          # (4, S_pad)
    lhs = jnp.concatenate([
        close * p[0:1, :],                       # EMA(close, 3)  numerator
        close * p[1:2, :],                       # EMA(close, 6)
        close * p[2:3, :],                       # EMA(close, 12)
        close * p[3:4, :],                       # EMA(close, 24)
        volume * p[1:2, :],                      # EMA(volume, 6)
        volume * p[2:3, :],                      # EMA(volume, 12)
        volume * mult,                           # OBV flow
        gain,                                    # RSI gains
        loss,                                    # RSI losses
    ], axis=0)                                   # (9*TB, S_pad)
    cs = jnp.dot(lhs, c_ref[...], preferred_element_type=jnp.float32)

    def blk(i):
        return cs[i * tb:(i + 1) * tb, :]

    close_ema3 = blk(0) * sc[0:1, :]
    close_ema6 = blk(1) * sc[1:2, :]
    close_ema12 = blk(2) * sc[2:3, :]
    close_ema24 = blk(3) * sc[3:4, :]
    vol_ema6 = blk(4) * sc[1:2, :]
    vol_ema12 = blk(5) * sc[2:3, :]
    obv = blk(6)
    cs_gain = blk(7)
    cs_loss = blk(8)

    # ---- RSI: replicate-pad + width-14 moving average == cumsum diff + edge term --
    w = float(RSI_WINDOW)
    edge = jnp.maximum(w - ti.astype(jnp.float32), 0.0)          # W, W-1, ..., 1, 0, ...
    avg_gain = (cs_gain - lag(cs_gain, RSI_WINDOW) + edge * gain[:, 1:2]) * (1.0 / w)
    avg_loss = (cs_loss - lag(cs_loss, RSI_WINDOW) + edge * loss[:, 1:2]) * (1.0 / w)
    # 100 - 100/(1 + g/(l+eps))  ==  100 * g / (g + l + eps)
    rsi = 100.0 * avg_gain * pl.reciprocal(avg_gain + avg_loss + EPS)

    # ---- hoisted reciprocals ------------------------------------------------------
    inv_close_eps = pl.reciprocal(close + EPS)
    inv_close = pl.reciprocal(close)             # reference divides EMA ratios by raw close
    inv_vol = pl.reciprocal(volume + EPS)
    inv_ema12 = pl.reciprocal(close_ema12 + EPS)

    hl_ratio = (high - low) * inv_close_eps
    oc_abs = jnp.abs(open_ - close) * inv_close_eps

    hour_sin = jnp.broadcast_to(hours_ref[0:1, :], (tb, s_pad))
    hour_cos = jnp.broadcast_to(hours_ref[1:2, :], (tb, s_pad))

    ret_last = jnp.broadcast_to(returns[:, seq_len - 1:seq_len], (tb, s_pad))
    hl_last = jnp.broadcast_to(hl_ratio[:, seq_len - 1:seq_len], (tb, s_pad))

    # ---- per-feature nan_to_num + masked instance norm + direct store -------------
    def emit(idx, feat, clean=True):
        if clean:                                 # only where the feature can go non-finite
            feat = jnp.nan_to_num(feat, nan=0.0)
        feat = jnp.where(valid, feat, 0.0)        # exclude padded lanes from the stats
        mean = jnp.sum(feat, axis=-1, keepdims=True) * inv_n
        cen = jnp.where(valid, feat - mean, 0.0)
        var = jnp.sum(cen * cen, axis=-1, keepdims=True) * inv_n
        out_ref[:, idx:idx + 1, :] = (cen * lax.rsqrt(var + IN_EPS))[:, None, :]

    emit(0, open_, clean=False)
    emit(1, high, clean=False)
    emit(2, low, clean=False)
    emit(3, close, clean=False)
    emit(4, volume, clean=False)
    emit(5, returns)
    emit(6, jnp.abs(returns))
    emit(7, hl_ratio)
    emit(8, oc_abs)
    emit(9, close_ema3 * inv_close)
    emit(10, close_ema6 * inv_close)
    emit(11, close_ema12 * inv_close)
    emit(12, close_ema24 * inv_close)
    emit(13, vol_ema6 * inv_vol)
    emit(14, vol_ema12 * inv_vol)
    emit(15, jnp.log1p(volume))
    emit(16, hour_sin, clean=False)
    emit(17, hour_cos, clean=False)
    emit(18, momentum_3)
    emit(19, momentum_6)
    emit(20, (close - close_ema12) * inv_ema12)
    emit(21, rsi)
    emit(22, obv, clean=False)
    emit(23, ret_last)
    emit(24, hl_last)


@jax.jit
def enhanced_feature_layer(x: jax.Array) -> jax.Array:
    """x: (B, S, 5) float OHLCV  ->  (B, S, 25) instance-normalized engineered features."""
    B, S, F = x.shape
    assert F == 5, "expected OHLCV input with 5 channels"
    s_pad = ((S + 127) // 128) * 128             # lane-aligned sequence length

    x_t = jnp.transpose(x.astype(jnp.float32), (0, 2, 1))        # (B, 5, S)
    if s_pad != S:
        x_t = jnp.pad(x_t, ((0, 0), (0, 0), (0, s_pad - S)))

    C, pows, scale, hours = _build_constants(s_pad)
    tb = _pick_tb(B)

    # VMEM note: the only SxS constant left is C (double-buffered 2*4*s_pad^2 bytes);
    # it fits the 32 MiB scoped default up to s_pad ~= 2048.
    out = pl.pallas_call(
        functools.partial(_feature_kernel, seq_len=S),
        out_shape=jax.ShapeDtypeStruct((B, NUM_FEATURES, s_pad), jnp.float32),
        grid=(B // tb,),
        in_specs=[
            pl.BlockSpec((tb, 5, s_pad), lambda i: (i, 0, 0)),
            pl.BlockSpec((s_pad, s_pad), lambda i: (0, 0)),
            pl.BlockSpec((len(EMA_SPANS), s_pad), lambda i: (0, 0)),
            pl.BlockSpec((len(EMA_SPANS), s_pad), lambda i: (0, 0)),
            pl.BlockSpec((2, s_pad), lambda i: (0, 0)),
        ],
        out_specs=pl.BlockSpec((tb, NUM_FEATURES, s_pad), lambda i: (i, 0, 0)),
        compiler_params=pltpu.CompilerParams(
            dimension_semantics=("parallel",)),
    )(x_t, C, pows, scale, hours)

    return jnp.transpose(out[:, :, :S], (0, 2, 1))               # (B, S, 25)


if __name__ == "__main__":
    B, S = 2, 24          # module default seq_length=24
    key = jax.random.PRNGKey(0)
    k_price, k_vol = jax.random.split(key)
    ohlc = 2000.0 * jnp.exp(0.01 * jax.random.normal(k_price, (B, S, 4)))
    vol = 100.0 * jnp.exp(0.3 * jax.random.normal(k_vol, (B, S, 1)))
    x = jnp.concatenate([ohlc, vol], axis=-1).astype(jnp.float32)   # (B, S, 5)

    feats = jax.block_until_ready(enhanced_feature_layer(x))
    assert feats.shape == (B, S, NUM_FEATURES), feats.shape
    assert feats.dtype == jnp.float32
    assert bool(jnp.all(jnp.isfinite(feats)))
    print("KERNEL_OK")
</pallas_src>

<mosaic_0001>
module attributes {stable_mosaic.version = 11 : i64} {
  func.func @_feature_kernel(%arg0: i32, %arg1: memref<1x5x128xf32, #tpu.memory_space<vmem>>, %arg2: memref<128x128xf32, #tpu.memory_space<vmem>>, %arg3: memref<4x128xf32, #tpu.memory_space<vmem>>, %arg4: memref<4x128xf32, #tpu.memory_space<vmem>>, %arg5: memref<2x128xf32, #tpu.memory_space<vmem>>, %arg6: memref<1x25x128xf32, #tpu.memory_space<vmem>>) attributes {dimension_semantics = [#tpu.dimension_semantics<parallel>], iteration_bounds = array<i64: 2>, scalar_prefetch = 0 : i64, scratch_operands = 0 : i64, tpu.core_type = #tpu.core_type<tc>, window_params = [{transform_indices = @transform_0, window_bounds = array<i64: 1, 5, 128>}, {pipeline_mode = #tpu.pipeline_mode<synchronous>, transform_indices = @transform_1, window_bounds = array<i64: 128, 128>}, {pipeline_mode = #tpu.pipeline_mode<synchronous>, transform_indices = @transform_2, window_bounds = array<i64: 4, 128>}, {pipeline_mode = #tpu.pipeline_mode<synchronous>, transform_indices = @transform_3, window_bounds = array<i64: 4, 128>}, {pipeline_mode = #tpu.pipeline_mode<synchronous>, transform_indices = @transform_4, window_bounds = array<i64: 2, 128>}, {transform_indices = @transform_5, window_bounds = array<i64: 1, 25, 128>}]} {
    %c0 = arith.constant 0 : index
    %c0_0 = arith.constant 0 : index
    %c0_1 = arith.constant 0 : index
    %0 = vector.load %arg1[%c0, %c0_0, %c0_1] : memref<1x5x128xf32, #tpu.memory_space<vmem>>, vector<1x5x128xf32>
    %1 = vector.extract_strided_slice %0 {offsets = [0, 0, 0], sizes = [1, 1, 128], strides = [1, 1, 1]} : vector<1x5x128xf32> to vector<1x1x128xf32>
    %2 = vector.shape_cast %1 : vector<1x1x128xf32> to vector<1x128xf32>
    %3 = vector.extract_strided_slice %0 {offsets = [0, 1, 0], sizes = [1, 1, 128], strides = [1, 1, 1]} : vector<1x5x128xf32> to vector<1x1x128xf32>
    %4 = vector.shape_cast %3 : vector<1x1x128xf32> to vector<1x128xf32>
    %5 = vector.extract_strided_slice %0 {offsets = [0, 2, 0], sizes = [1, 1, 128], strides = [1, 1, 1]} : vector<1x5x128xf32> to vector<1x1x128xf32>
    %6 = vector.shape_cast %5 : vector<1x1x128xf32> to vector<1x128xf32>
    %7 = vector.extract_strided_slice %0 {offsets = [0, 3, 0], sizes = [1, 1, 128], strides = [1, 1, 1]} : vector<1x5x128xf32> to vector<1x1x128xf32>
    %8 = vector.shape_cast %7 : vector<1x1x128xf32> to vector<1x128xf32>
    %9 = vector.extract_strided_slice %0 {offsets = [0, 4, 0], sizes = [1, 1, 128], strides = [1, 1, 1]} : vector<1x5x128xf32> to vector<1x1x128xf32>
    %10 = vector.shape_cast %9 : vector<1x1x128xf32> to vector<1x128xf32>
    %11 = tpu.iota {dimensions = array<i32: 1>} : vector<1x128xi32>
    %c24_i32 = arith.constant 24 : i32
    %12 = vector.broadcast %c24_i32 : i32 to vector<1x128xi32>
    %13 = arith.cmpi slt, %11, %12 : vector<1x128xi32>
    %cst = arith.constant 9.99999993E-9 : f32
    %14 = vector.broadcast %cst : f32 to vector<1x128xf32>
    %15 = arith.addf %8, %14 : vector<1x128xf32>
    %16 = math.log %15 : vector<1x128xf32>
    %c1_i32 = arith.constant 1 : i32
    %17 = vector.broadcast %c1_i32 : i32 to vector<1x128xi32>
    %18 = arith.cmpi sge, %11, %17 : vector<1x128xi32>
    %c1_i32_2 = arith.constant 1 : i32
    %19 = tpu.dynamic_rotate %16 by %c1_i32_2 dim 1 : vector<1x128xf32>, i32 -> vector<1x128xf32>
    %20 = arith.subf %16, %19 : vector<1x128xf32>
    %cst_3 = arith.constant 0.000000e+00 : f32
    %21 = vector.broadcast %cst_3 : f32 to vector<1x128xf32>
    %22 = arith.select %18, %20, %21 : vector<1x128xi1>, vector<1x128xf32>
    %c3_i32 = arith.constant 3 : i32
    %23 = vector.broadcast %c3_i32 : i32 to vector<1x128xi32>
    %24 = arith.cmpi sge, %11, %23 : vector<1x128xi32>
    %c3_i32_4 = arith.constant 3 : i32
    %25 = tpu.dynamic_rotate %16 by %c3_i32_4 dim 1 : vector<1x128xf32>, i32 -> vector<1x128xf32>
    %26 = arith.subf %16, %25 : vector<1x128xf32>
    %cst_5 = arith.constant 0.000000e+00 : f32
    %27 = vector.broadcast %cst_5 : f32 to vector<1x128xf32>
    %28 = arith.select %24, %26, %27 : vector<1x128xi1>, vector<1x128xf32>
    %c6_i32 = arith.constant 6 : i32
    %29 = vector.broadcast %c6_i32 : i32 to vector<1x128xi32>
    %30 = arith.cmpi sge, %11, %29 : vector<1x128xi32>
    %c6_i32_6 = arith.constant 6 : i32
    %31 = tpu.dynamic_rotate %16 by %c6_i32_6 dim 1 : vector<1x128xf32>, i32 -> vector<1x128xf32>
    %32 = arith.subf %16, %31 : vector<1x128xf32>
    %cst_7 = arith.constant 0.000000e+00 : f32
    %33 = vector.broadcast %cst_7 : f32 to vector<1x128xf32>
    %34 = arith.select %30, %32, %33 : vector<1x128xi1>, vector<1x128xf32>
    %c1_i32_8 = arith.constant 1 : i32
    %35 = vector.broadcast %c1_i32_8 : i32 to vector<1x128xi32>
    %36 = arith.cmpi sge, %11, %35 : vector<1x128xi32>
    %c1_i32_9 = arith.constant 1 : i32
    %37 = tpu.dynamic_rotate %8 by %c1_i32_9 dim 1 : vector<1x128xf32>, i32 -> vector<1x128xf32>
    %38 = arith.subf %8, %37 : vector<1x128xf32>
    %cst_10 = arith.constant 0.000000e+00 : f32
    %39 = vector.broadcast %cst_10 : f32 to vector<1x128xf32>
    %40 = arith.select %36, %38, %39 : vector<1x128xi1>, vector<1x128xf32>
    %cst_11 = arith.constant 0.000000e+00 : f32
    %41 = vector.broadcast %cst_11 : f32 to vector<1x128xf32>
    %42 = arith.maximumf %40, %41 : vector<1x128xf32>
    %cst_12 = arith.constant 0.000000e+00 : f32
    %43 = vector.broadcast %cst_12 : f32 to vector<1x128xf32>
    %44 = arith.subf %43, %40 : vector<1x128xf32>
    %cst_13 = arith.constant 0.000000e+00 : f32
    %45 = vector.broadcast %cst_13 : f32 to vector<1x128xf32>
    %46 = arith.maximumf %44, %45 : vector<1x128xf32>
    %cst_14 = arith.constant 0.000000e+00 : f32
    %47 = vector.broadcast %cst_14 : f32 to vector<1x128xf32>
    %48 = arith.cmpf ogt, %40, %47 : vector<1x128xf32>
    %cst_15 = arith.constant 0.000000e+00 : f32
    %49 = vector.broadcast %cst_15 : f32 to vector<1x128xf32>
    %50 = arith.cmpf olt, %40, %49 : vector<1x128xf32>
    %cst_16 = arith.constant -1.000000e+00 : f32
    %cst_17 = arith.constant 0.000000e+00 : f32
    %51 = vector.broadcast %cst_16 : f32 to vector<1x128xf32>
    %52 = vector.broadcast %cst_17 : f32 to vector<1x128xf32>
    %53 = arith.select %50, %51, %52 : vector<1x128xi1>, vector<1x128xf32>
    %cst_18 = arith.constant 1.000000e+00 : f32
    %54 = vector.broadcast %cst_18 : f32 to vector<1x128xf32>
    %55 = arith.select %48, %54, %53 : vector<1x128xi1>, vector<1x128xf32>
    %c0_19 = arith.constant 0 : index
    %c0_20 = arith.constant 0 : index
    %56 = vector.load %arg3[%c0_19, %c0_20] : memref<4x128xf32, #tpu.memory_space<vmem>>, vector<4x128xf32>
    %c0_21 = arith.constant 0 : index
    %c0_22 = arith.constant 0 : index
    %57 = vector.load %arg4[%c0_21, %c0_22] : memref<4x128xf32, #tpu.memory_space<vmem>>, vector<4x128xf32>
    %58 = vector.extract_strided_slice %56 {offsets = [0, 0], sizes = [1, 128], strides = [1, 1]} : vector<4x128xf32> to vector<1x128xf32>
    %59 = arith.mulf %8, %58 : vector<1x128xf32>
    %60 = vector.extract_strided_slice %56 {offsets = [1, 0], sizes = [1, 128], strides = [1, 1]} : vector<4x128xf32> to vector<1x128xf32>
    %61 = arith.mulf %8, %60 : vector<1x128xf32>
    %62 = vector.extract_strided_slice %56 {offsets = [2, 0], sizes = [1, 128], strides = [1, 1]} : vector<4x128xf32> to vector<1x128xf32>
    %63 = arith.mulf %8, %62 : vector<1x128xf32>
    %64 = vector.extract_strided_slice %56 {offsets = [3, 0], sizes = [1, 128], strides = [1, 1]} : vector<4x128xf32> to vector<1x128xf32>
    %65 = arith.mulf %8, %64 : vector<1x128xf32>
    %66 = vector.extract_strided_slice %56 {offsets = [1, 0], sizes = [1, 128], strides = [1, 1]} : vector<4x128xf32> to vector<1x128xf32>
    %67 = arith.mulf %10, %66 : vector<1x128xf32>
    %68 = vector.extract_strided_slice %56 {offsets = [2, 0], sizes = [1, 128], strides = [1, 1]} : vector<4x128xf32> to vector<1x128xf32>
    %69 = arith.mulf %10, %68 : vector<1x128xf32>
    %70 = arith.mulf %10, %55 : vector<1x128xf32>
    %71 = tpu.concatenate %59, %61, %63, %65, %67, %69, %70, %42, %46 in 0 : vector<1x128xf32>, vector<1x128xf32>, vector<1x128xf32>, vector<1x128xf32>, vector<1x128xf32>, vector<1x128xf32>, vector<1x128xf32>, vector<1x128xf32>, vector<1x128xf32> -> vector<9x128xf32>
    %c0_23 = arith.constant 0 : index
    %c0_24 = arith.constant 0 : index
    %72 = vector.load %arg2[%c0_23, %c0_24] : memref<128x128xf32, #tpu.memory_space<vmem>>, vector<128x128xf32>
    %cst_25 = arith.constant dense<0.000000e+00> : vector<9x128xf32>
    %73 = tpu.matmul %71, %72, %cst_25 {dimension_numbers = #tpu.dot_dimension_numbers<[1], [0], [0], [1], [0, 0, 1, 1], [], []>} : vector<9x128xf32>, vector<128x128xf32>, vector<9x128xf32> -> vector<9x128xf32>
    %74 = vector.extract_strided_slice %73 {offsets = [0, 0], sizes = [1, 128], strides = [1, 1]} : vector<9x128xf32> to vector<1x128xf32>
    %75 = vector.extract_strided_slice %57 {offsets = [0, 0], sizes = [1, 128], strides = [1, 1]} : vector<4x128xf32> to vector<1x128xf32>
    %76 = arith.mulf %74, %75 : vector<1x128xf32>
    %77 = vector.extract_strided_slice %73 {offsets = [1, 0], sizes = [1, 128], strides = [1, 1]} : vector<9x128xf32> to vector<1x128xf32>
    %78 = vector.extract_strided_slice %57 {offsets = [1, 0], sizes = [1, 128], strides = [1, 1]} : vector<4x128xf32> to vector<1x128xf32>
    %79 = arith.mulf %77, %78 : vector<1x128xf32>
    %80 = vector.extract_strided_slice %73 {offsets = [2, 0], sizes = [1, 128], strides = [1, 1]} : vector<9x128xf32> to vector<1x128xf32>
    %81 = vector.extract_strided_slice %57 {offsets = [2, 0], sizes = [1, 128], strides = [1, 1]} : vector<4x128xf32> to vector<1x128xf32>
    %82 = arith.mulf %80, %81 : vector<1x128xf32>
    %83 = vector.extract_strided_slice %73 {offsets = [3, 0], sizes = [1, 128], strides = [1, 1]} : vector<9x128xf32> to vector<1x128xf32>
    %84 = vector.extract_strided_slice %57 {offsets = [3, 0], sizes = [1, 128], strides = [1, 1]} : vector<4x128xf32> to vector<1x128xf32>
    %85 = arith.mulf %83, %84 : vector<1x128xf32>
    %86 = vector.extract_strided_slice %73 {offsets = [4, 0], sizes = [1, 128], strides = [1, 1]} : vector<9x128xf32> to vector<1x128xf32>
    %87 = vector.extract_strided_slice %57 {offsets = [1, 0], sizes = [1, 128], strides = [1, 1]} : vector<4x128xf32> to vector<1x128xf32>
    %88 = arith.mulf %86, %87 : vector<1x128xf32>
    %89 = vector.extract_strided_slice %73 {offsets = [5, 0], sizes = [1, 128], strides = [1, 1]} : vector<9x128xf32> to vector<1x128xf32>
    %90 = vector.extract_strided_slice %57 {offsets = [2, 0], sizes = [1, 128], strides = [1, 1]} : vector<4x128xf32> to vector<1x128xf32>
    %91 = arith.mulf %89, %90 : vector<1x128xf32>
    %92 = vector.extract_strided_slice %73 {offsets = [6, 0], sizes = [1, 128], strides = [1, 1]} : vector<9x128xf32> to vector<1x128xf32>
    %93 = vector.extract_strided_slice %73 {offsets = [7, 0], sizes = [1, 128], strides = [1, 1]} : vector<9x128xf32> to vector<1x128xf32>
    %94 = vector.extract_strided_slice %73 {offsets = [8, 0], sizes = [1, 128], strides = [1, 1]} : vector<9x128xf32> to vector<1x128xf32>
    %95 = arith.sitofp %11 : vector<1x128xi32> to vector<1x128xf32>
    %cst_26 = arith.constant 1.400000e+01 : f32
    %96 = vector.broadcast %cst_26 : f32 to vector<1x128xf32>
    %97 = arith.subf %96, %95 : vector<1x128xf32>
    %cst_27 = arith.constant 0.000000e+00 : f32
    %98 = vector.broadcast %cst_27 : f32 to vector<1x128xf32>
    %99 = arith.maximumf %97, %98 : vector<1x128xf32>
    %c14_i32 = arith.constant 14 : i32
    %100 = vector.broadcast %c14_i32 : i32 to vector<1x128xi32>
    %101 = arith.cmpi sge, %11, %100 : vector<1x128xi32>
    %c14_i32_28 = arith.constant 14 : i32
    %102 = tpu.dynamic_rotate %93 by %c14_i32_28 dim 1 : vector<1x128xf32>, i32 -> vector<1x128xf32>
    %cst_29 = arith.constant 0.000000e+00 : f32
    %103 = vector.broadcast %cst_29 : f32 to vector<1x128xf32>
    %104 = arith.select %101, %102, %103 : vector<1x128xi1>, vector<1x128xf32>
    %105 = arith.subf %93, %104 : vector<1x128xf32>
    %106 = vector.extract_strided_slice %42 {offsets = [0, 1], sizes = [1, 1], strides = [1, 1]} : vector<1x128xf32> to vector<1x1xf32>
    %107 = vector.broadcast %106 : vector<1x1xf32> to vector<1x128xf32>
    %108 = arith.mulf %99, %107 : vector<1x128xf32>
    %109 = arith.addf %105, %108 : vector<1x128xf32>
    %cst_30 = arith.constant 0.0714285746 : f32
    %110 = vector.broadcast %cst_30 : f32 to vector<1x128xf32>
    %111 = arith.mulf %109, %110 : vector<1x128xf32>
    %c14_i32_31 = arith.constant 14 : i32
    %112 = vector.broadcast %c14_i32_31 : i32 to vector<1x128xi32>
    %113 = arith.cmpi sge, %11, %112 : vector<1x128xi32>
    %c14_i32_32 = arith.constant 14 : i32
    %114 = tpu.dynamic_rotate %94 by %c14_i32_32 dim 1 : vector<1x128xf32>, i32 -> vector<1x128xf32>
    %cst_33 = arith.constant 0.000000e+00 : f32
    %115 = vector.broadcast %cst_33 : f32 to vector<1x128xf32>
    %116 = arith.select %113, %114, %115 : vector<1x128xi1>, vector<1x128xf32>
    %117 = arith.subf %94, %116 : vector<1x128xf32>
    %118 = vector.extract_strided_slice %46 {offsets = [0, 1], sizes = [1, 1], strides = [1, 1]} : vector<1x128xf32> to vector<1x1xf32>
    %119 = vector.broadcast %118 : vector<1x1xf32> to vector<1x128xf32>
    %120 = arith.mulf %99, %119 : vector<1x128xf32>
    %121 = arith.addf %117, %120 : vector<1x128xf32>
    %cst_34 = arith.constant 0.0714285746 : f32
    %122 = vector.broadcast %cst_34 : f32 to vector<1x128xf32>
    %123 = arith.mulf %121, %122 : vector<1x128xf32>
    %cst_35 = arith.constant 1.000000e+02 : f32
    %124 = vector.broadcast %cst_35 : f32 to vector<1x128xf32>
    %125 = arith.mulf %124, %111 : vector<1x128xf32>
    %126 = arith.addf %111, %123 : vector<1x128xf32>
    %cst_36 = arith.constant 9.99999993E-9 : f32
    %127 = vector.broadcast %cst_36 : f32 to vector<1x128xf32>
    %128 = arith.addf %126, %127 : vector<1x128xf32>
    %129 = tpu.reciprocal %128 : vector<1x128xf32> -> vector<1x128xf32>
    %130 = arith.mulf %125, %129 : vector<1x128xf32>
    %cst_37 = arith.constant 9.99999993E-9 : f32
    %131 = vector.broadcast %cst_37 : f32 to vector<1x128xf32>
    %132 = arith.addf %8, %131 : vector<1x128xf32>
    %133 = tpu.reciprocal %132 : vector<1x128xf32> -> vector<1x128xf32>
    %134 = tpu.reciprocal %8 : vector<1x128xf32> -> vector<1x128xf32>
    %cst_38 = arith.constant 9.99999993E-9 : f32
    %135 = vector.broadcast %cst_38 : f32 to vector<1x128xf32>
    %136 = arith.addf %10, %135 : vector<1x128xf32>
    %137 = tpu.reciprocal %136 : vector<1x128xf32> -> vector<1x128xf32>
    %cst_39 = arith.constant 9.99999993E-9 : f32
    %138 = vector.broadcast %cst_39 : f32 to vector<1x128xf32>
    %139 = arith.addf %82, %138 : vector<1x128xf32>
    %140 = tpu.reciprocal %139 : vector<1x128xf32> -> vector<1x128xf32>
    %141 = arith.subf %4, %6 : vector<1x128xf32>
    %142 = arith.mulf %141, %133 : vector<1x128xf32>
    %143 = arith.subf %2, %8 : vector<1x128xf32>
    %144 = math.absf %143 : vector<1x128xf32>
    %145 = arith.mulf %144, %133 : vector<1x128xf32>
    %c0_40 = arith.constant 0 : index
    %c0_41 = arith.constant 0 : index
    %146 = vector.load %arg5[%c0_40, %c0_41] : memref<2x128xf32, #tpu.memory_space<vmem>>, vector<1x128xf32>
    %c1 = arith.constant 1 : index
    %c0_42 = arith.constant 0 : index
    %147 = vector.load %arg5[%c1, %c0_42] : memref<2x128xf32, #tpu.memory_space<vmem>>, vector<1x128xf32>
    %148 = vector.extract_strided_slice %22 {offsets = [0, 23], sizes = [1, 1], strides = [1, 1]} : vector<1x128xf32> to vector<1x1xf32>
    %149 = vector.shape_cast %148 : vector<1x1xf32> to vector<1x1xf32>
    %150 = vector.broadcast %149 : vector<1x1xf32> to vector<1x128xf32>
    %151 = vector.extract_strided_slice %142 {offsets = [0, 23], sizes = [1, 1], strides = [1, 1]} : vector<1x128xf32> to vector<1x1xf32>
    %152 = vector.shape_cast %151 : vector<1x1xf32> to vector<1x1xf32>
    %153 = vector.broadcast %152 : vector<1x1xf32> to vector<1x128xf32>
    %cst_43 = arith.constant 0.000000e+00 : f32
    %154 = vector.broadcast %cst_43 : f32 to vector<1x128xf32>
    %155 = arith.select %13, %2, %154 : vector<1x128xi1>, vector<1x128xf32>
    %cst_44 = arith.constant dense<0.000000e+00> : vector<1xf32>
    %156 = vector.multi_reduction <add>, %155, %cst_44 [1] : vector<1x128xf32> to vector<1xf32>
    %157 = vector.shape_cast %156 : vector<1xf32> to vector<1x1xf32>
    %cst_45 = arith.constant 0.0416666679 : f32
    %158 = vector.broadcast %cst_45 : f32 to vector<1x1xf32>
    %159 = arith.mulf %157, %158 : vector<1x1xf32>
    %160 = vector.broadcast %159 : vector<1x1xf32> to vector<1x128xf32>
    %161 = arith.subf %155, %160 : vector<1x128xf32>
    %cst_46 = arith.constant 0.000000e+00 : f32
    %162 = vector.broadcast %cst_46 : f32 to vector<1x128xf32>
    %163 = arith.select %13, %161, %162 : vector<1x128xi1>, vector<1x128xf32>
    %164 = arith.mulf %163, %163 : vector<1x128xf32>
    %cst_47 = arith.constant dense<0.000000e+00> : vector<1xf32>
    %165 = vector.multi_reduction <add>, %164, %cst_47 [1] : vector<1x128xf32> to vector<1xf32>
    %166 = vector.shape_cast %165 : vector<1xf32> to vector<1x1xf32>
    %cst_48 = arith.constant 0.0416666679 : f32
    %167 = vector.broadcast %cst_48 : f32 to vector<1x1xf32>
    %168 = arith.mulf %166, %167 : vector<1x1xf32>
    %cst_49 = arith.constant 9.99999974E-6 : f32
    %169 = vector.broadcast %cst_49 : f32 to vector<1x1xf32>
    %170 = arith.addf %168, %169 : vector<1x1xf32>
    %171 = math.rsqrt %170 : vector<1x1xf32>
    %172 = vector.broadcast %171 : vector<1x1xf32> to vector<1x128xf32>
    %173 = arith.mulf %163, %172 : vector<1x128xf32>
    %174 = vector.shape_cast %173 : vector<1x128xf32> to vector<1x1x128xf32>
    %c0_50 = arith.constant 0 : index
    %c0_51 = arith.constant 0 : index
    %c0_52 = arith.constant 0 : index
    %175 = vector.load %arg6[%c0_50, %c0_51, %c0_52] : memref<1x25x128xf32, #tpu.memory_space<vmem>>, vector<1x1x128xf32>
    tpu.vector_store %arg6[%c0_50, %c0_51, %c0_52], %174 {strides = array<i32>} : memref<1x25x128xf32, #tpu.memory_space<vmem>>, vector<1x1x128xf32>,
    %cst_53 = arith.constant 0.000000e+00 : f32
    %176 = vector.broadcast %cst_53 : f32 to vector<1x128xf32>
    %177 = arith.select %13, %4, %176 : vector<1x128xi1>, vector<1x128xf32>
    %cst_54 = arith.constant dense<0.000000e+00> : vector<1xf32>
    %178 = vector.multi_reduction <add>, %177, %cst_54 [1] : vector<1x128xf32> to vector<1xf32>
    %179 = vector.shape_cast %178 : vector<1xf32> to vector<1x1xf32>
    %cst_55 = arith.constant 0.0416666679 : f32
    %180 = vector.broadcast %cst_55 : f32 to vector<1x1xf32>
    %181 = arith.mulf %179, %180 : vector<1x1xf32>
    %182 = vector.broadcast %181 : vector<1x1xf32> to vector<1x128xf32>
    %183 = arith.subf %177, %182 : vector<1x128xf32>
    %cst_56 = arith.constant 0.000000e+00 : f32
    %184 = vector.broadcast %cst_56 : f32 to vector<1x128xf32>
    %185 = arith.select %13, %183, %184 : vector<1x128xi1>, vector<1x128xf32>
    %186 = arith.mulf %185, %185 : vector<1x128xf32>
    %cst_57 = arith.constant dense<0.000000e+00> : vector<1xf32>
    %187 = vector.multi_reduction <add>, %186, %cst_57 [1] : vector<1x128xf32> to vector<1xf32>
    %188 = vector.shape_cast %187 : vector<1xf32> to vector<1x1xf32>
    %cst_58 = arith.constant 0.0416666679 : f32
    %189 = vector.broadcast %cst_58 : f32 to vector<1x1xf32>
    %190 = arith.mulf %188, %189 : vector<1x1xf32>
    %cst_59 = arith.constant 9.99999974E-6 : f32
    %191 = vector.broadcast %cst_59 : f32 to vector<1x1xf32>
    %192 = arith.addf %190, %191 : vector<1x1xf32>
    %193 = math.rsqrt %192 : vector<1x1xf32>
    %194 = vector.broadcast %193 : vector<1x1xf32> to vector<1x128xf32>
    %195 = arith.mulf %185, %194 : vector<1x128xf32>
    %196 = vector.shape_cast %195 : vector<1x128xf32> to vector<1x1x128xf32>
    %c0_60 = arith.constant 0 : index
    %c1_61 = arith.constant 1 : index
    %c0_62 = arith.constant 0 : index
    %197 = vector.load %arg6[%c0_60, %c1_61, %c0_62] : memref<1x25x128xf32, #tpu.memory_space<vmem>>, vector<1x1x128xf32>
    tpu.vector_store %arg6[%c0_60, %c1_61, %c0_62], %196 {strides = array<i32>} : memref<1x25x128xf32, #tpu.memory_space<vmem>>, vector<1x1x128xf32>,
    %cst_63 = arith.constant 0.000000e+00 : f32
    %198 = vector.broadcast %cst_63 : f32 to vector<1x128xf32>
    %199 = arith.select %13, %6, %198 : vector<1x128xi1>, vector<1x128xf32>
    %cst_64 = arith.constant dense<0.000000e+00> : vector<1xf32>
    %200 = vector.multi_reduction <add>, %199, %cst_64 [1] : vector<1x128xf32> to vector<1xf32>
    %201 = vector.shape_cast %200 : vector<1xf32> to vector<1x1xf32>
    %cst_65 = arith.constant 0.0416666679 : f32
    %202 = vector.broadcast %cst_65 : f32 to vector<1x1xf32>
    %203 = arith.mulf %201, %202 : vector<1x1xf32>
    %204 = vector.broadcast %203 : vector<1x1xf32> to vector<1x128xf32>
    %205 = arith.subf %199, %204 : vector<1x128xf32>
    %cst_66 = arith.constant 0.000000e+00 : f32
    %206 = vector.broadcast %cst_66 : f32 to vector<1x128xf32>
    %207 = arith.select %13, %205, %206 : vector<1x128xi1>, vector<1x128xf32>
    %208 = arith.mulf %207, %207 : vector<1x128xf32>
    %cst_67 = arith.constant dense<0.000000e+00> : vector<1xf32>
    %209 = vector.multi_reduction <add>, %208, %cst_67 [1] : vector<1x128xf32> to vector<1xf32>
    %210 = vector.shape_cast %209 : vector<1xf32> to vector<1x1xf32>
    %cst_68 = arith.constant 0.0416666679 : f32
    %211 = vector.broadcast %cst_68 : f32 to vector<1x1xf32>
    %212 = arith.mulf %210, %211 : vector<1x1xf32>
    %cst_69 = arith.constant 9.99999974E-6 : f32
    %213 = vector.broadcast %cst_69 : f32 to vector<1x1xf32>
    %214 = arith.addf %212, %213 : vector<1x1xf32>
    %215 = math.rsqrt %214 : vector<1x1xf32>
    %216 = vector.broadcast %215 : vector<1x1xf32> to vector<1x128xf32>
    %217 = arith.mulf %207, %216 : vector<1x128xf32>
    %218 = vector.shape_cast %217 : vector<1x128xf32> to vector<1x1x128xf32>
    %c0_70 = arith.constant 0 : index
    %c2 = arith.constant 2 : index
    %c0_71 = arith.constant 0 : index
    %219 = vector.load %arg6[%c0_70, %c2, %c0_71] : memref<1x25x128xf32, #tpu.memory_space<vmem>>, vector<1x1x128xf32>
    tpu.vector_store %arg6[%c0_70, %c2, %c0_71], %218 {strides = array<i32>} : memref<1x25x128xf32, #tpu.memory_space<vmem>>, vector<1x1x128xf32>,
    %cst_72 = arith.constant 0.000000e+00 : f32
    %220 = vector.broadcast %cst_72 : f32 to vector<1x128xf32>
    %221 = arith.select %13, %8, %220 : vector<1x128xi1>, vector<1x128xf32>
    %cst_73 = arith.constant dense<0.000000e+00> : vector<1xf32>
    %222 = vector.multi_reduction <add>, %221, %cst_73 [1] : vector<1x128xf32> to vector<1xf32>
    %223 = vector.shape_cast %222 : vector<1xf32> to vector<1x1xf32>
    %cst_74 = arith.constant 0.0416666679 : f32
    %224 = vector.broadcast %cst_74 : f32 to vector<1x1xf32>
    %225 = arith.mulf %223, %224 : vector<1x1xf32>
    %226 = vector.broadcast %225 : vector<1x1xf32> to vector<1x128xf32>
    %227 = arith.subf %221, %226 : vector<1x128xf32>
    %cst_75 = arith.constant 0.000000e+00 : f32
    %228 = vector.broadcast %cst_75 : f32 to vector<1x128xf32>
    %229 = arith.select %13, %227, %228 : vector<1x128xi1>, vector<1x128xf32>
    %230 = arith.mulf %229, %229 : vector<1x128xf32>
    %cst_76 = arith.constant dense<0.000000e+00> : vector<1xf32>
    %231 = vector.multi_reduction <add>, %230, %cst_76 [1] : vector<1x128xf32> to vector<1xf32>
    %232 = vector.shape_cast %231 : vector<1xf32> to vector<1x1xf32>
    %cst_77 = arith.constant 0.0416666679 : f32
    %233 = vector.broadcast %cst_77 : f32 to vector<1x1xf32>
    %234 = arith.mulf %232, %233 : vector<1x1xf32>
    %cst_78 = arith.constant 9.99999974E-6 : f32
    %235 = vector.broadcast %cst_78 : f32 to vector<1x1xf32>
    %236 = arith.addf %234, %235 : vector<1x1xf32>
    %237 = math.rsqrt %236 : vector<1x1xf32>
    %238 = vector.broadcast %237 : vector<1x1xf32> to vector<1x128xf32>
    %239 = arith.mulf %229, %238 : vector<1x128xf32>
    %240 = vector.shape_cast %239 : vector<1x128xf32> to vector<1x1x128xf32>
    %c0_79 = arith.constant 0 : index
    %c3 = arith.constant 3 : index
    %c0_80 = arith.constant 0 : index
    %241 = vector.load %arg6[%c0_79, %c3, %c0_80] : memref<1x25x128xf32, #tpu.memory_space<vmem>>, vector<1x1x128xf32>
    tpu.vector_store %arg6[%c0_79, %c3, %c0_80], %240 {strides = array<i32>} : memref<1x25x128xf32, #tpu.memory_space<vmem>>, vector<1x1x128xf32>,
    %cst_81 = arith.constant 0.000000e+00 : f32
    %242 = vector.broadcast %cst_81 : f32 to vector<1x128xf32>
    %243 = arith.select %13, %10, %242 : vector<1x128xi1>, vector<1x128xf32>
    %cst_82 = arith.constant dense<0.000000e+00> : vector<1xf32>
    %244 = vector.multi_reduction <add>, %243, %cst_82 [1] : vector<1x128xf32> to vector<1xf32>
    %245 = vector.shape_cast %244 : vector<1xf32> to vector<1x1xf32>
    %cst_83 = arith.constant 0.0416666679 : f32
    %246 = vector.broadcast %cst_83 : f32 to vector<1x1xf32>
    %247 = arith.mulf %245, %246 : vector<1x1xf32>
    %248 = vector.broadcast %247 : vector<1x1xf32> to vector<1x128xf32>
    %249 = arith.subf %243, %248 : vector<1x128xf32>
    %cst_84 = arith.constant 0.000000e+00 : f32
    %250 = vector.broadcast %cst_84 : f32 to vector<1x128xf32>
    %251 = arith.select %13, %249, %250 : vector<1x128xi1>, vector<1x128xf32>
    %252 = arith.mulf %251, %251 : vector<1x128xf32>
    %cst_85 = arith.constant dense<0.000000e+00> : vector<1xf32>
    %253 = vector.multi_reduction <add>, %252, %cst_85 [1] : vector<1x128xf32> to vector<1xf32>
    %254 = vector.shape_cast %253 : vector<1xf32> to vector<1x1xf32>
    %cst_86 = arith.constant 0.0416666679 : f32
    %255 = vector.broadcast %cst_86 : f32 to vector<1x1xf32>
    %256 = arith.mulf %254, %255 : vector<1x1xf32>
    %cst_87 = arith.constant 9.99999974E-6 : f32
    %257 = vector.broadcast %cst_87 : f32 to vector<1x1xf32>
    %258 = arith.addf %256, %257 : vector<1x1xf32>
    %259 = math.rsqrt %258 : vector<1x1xf32>
    %260 = vector.broadcast %259 : vector<1x1xf32> to vector<1x128xf32>
    %261 = arith.mulf %251, %260 : vector<1x128xf32>
    %262 = vector.shape_cast %261 : vector<1x128xf32> to vector<1x1x128xf32>
    %c0_88 = arith.constant 0 : index
    %c4 = arith.constant 4 : index
    %c0_89 = arith.constant 0 : index
    %263 = vector.load %arg6[%c0_88, %c4, %c0_89] : memref<1x25x128xf32, #tpu.memory_space<vmem>>, vector<1x1x128xf32>
    tpu.vector_store %arg6[%c0_88, %c4, %c0_89], %262 {strides = array<i32>} : memref<1x25x128xf32, #tpu.memory_space<vmem>>, vector<1x1x128xf32>,
    %cst_90 = arith.constant 0.000000e+00 : f32
    %264 = arith.cmpf one, %22, %22 : vector<1x128xf32>
    %265 = vector.broadcast %cst_90 : f32 to vector<1x128xf32>
    %266 = arith.select %264, %265, %22 : vector<1x128xi1>, vector<1x128xf32>
    %cst_91 = arith.constant 0x7F800000 : f32
    %267 = vector.broadcast %cst_91 : f32 to vector<1x128xf32>
    %268 = arith.cmpf oeq, %266, %267 : vector<1x128xf32>
    %cst_92 = arith.constant 3.40282347E+38 : f32
    %269 = vector.broadcast %cst_92 : f32 to vector<1x128xf32>
    %270 = arith.select %268, %269, %266 : vector<1x128xi1>, vector<1x128xf32>
    %cst_93 = arith.constant 0xFF800000 : f32
    %271 = vector.broadcast %cst_93 : f32 to vector<1x128xf32>
    %272 = arith.cmpf oeq, %270, %271 : vector<1x128xf32>
    %cst_94 = arith.constant -3.40282347E+38 : f32
    %273 = vector.broadcast %cst_94 : f32 to vector<1x128xf32>
    %274 = arith.select %272, %273, %270 : vector<1x128xi1>, vector<1x128xf32>
    %cst_95 = arith.constant 0.000000e+00 : f32
    %275 = vector.broadcast %cst_95 : f32 to vector<1x128xf32>
    %276 = arith.select %13, %274, %275 : vector<1x128xi1>, vector<1x128xf32>
    %cst_96 = arith.constant dense<0.000000e+00> : vector<1xf32>
    %277 = vector.multi_reduction <add>, %276, %cst_96 [1] : vector<1x128xf32> to vector<1xf32>
    %278 = vector.shape_cast %277 : vector<1xf32> to vector<1x1xf32>
    %cst_97 = arith.constant 0.0416666679 : f32
    %279 = vector.broadcast %cst_97 : f32 to vector<1x1xf32>
    %280 = arith.mulf %278, %279 : vector<1x1xf32>
    %281 = vector.broadcast %280 : vector<1x1xf32> to vector<1x128xf32>
    %282 = arith.subf %276, %281 : vector<1x128xf32>
    %cst_98 = arith.constant 0.000000e+00 : f32
    %283 = vector.broadcast %cst_98 : f32 to vector<1x128xf32>
    %284 = arith.select %13, %282, %283 : vector<1x128xi1>, vector<1x128xf32>
    %285 = arith.mulf %284, %284 : vector<1x128xf32>
    %cst_99 = arith.constant dense<0.000000e+00> : vector<1xf32>
    %286 = vector.multi_reduction <add>, %285, %cst_99 [1] : vector<1x128xf32> to vector<1xf32>
    %287 = vector.shape_cast %286 : vector<1xf32> to vector<1x1xf32>
    %cst_100 = arith.constant 0.0416666679 : f32
    %288 = vector.broadcast %cst_100 : f32 to vector<1x1xf32>
    %289 = arith.mulf %287, %288 : vector<1x1xf32>
    %cst_101 = arith.constant 9.99999974E-6 : f32
    %290 = vector.broadcast %cst_101 : f32 to vector<1x1xf32>
    %291 = arith.addf %289, %290 : vector<1x1xf32>
    %292 = math.rsqrt %291 : vector<1x1xf32>
    %293 = vector.broadcast %292 : vector<1x1xf32> to vector<1x128xf32>
    %294 = arith.mulf %284, %293 : vector<1x128xf32>
    %295 = vector.shape_cast %294 : vector<1x128xf32> to vector<1x1x128xf32>
    %c0_102 = arith.constant 0 : index
    %c5 = arith.constant 5 : index
    %c0_103 = arith.constant 0 : index
    %296 = vector.load %arg6[%c0_102, %c5, %c0_103] : memref<1x25x128xf32, #tpu.memory_space<vmem>>, vector<1x1x128xf32>
    tpu.vector_store %arg6[%c0_102, %c5, %c0_103], %295 {strides = array<i32>} : memref<1x25x128xf32, #tpu.memory_space<vmem>>, vector<1x1x128xf32>,
    %297 = math.absf %22 : vector<1x128xf32>
    %cst_104 = arith.constant 0.000000e+00 : f32
    %298 = arith.cmpf one, %297, %297 : vector<1x128xf32>
    %299 = vector.broadcast %cst_104 : f32 to vector<1x128xf32>
    %300 = arith.select %298, %299, %297 : vector<1x128xi1>, vector<1x128xf32>
    %cst_105 = arith.constant 0x7F800000 : f32
    %301 = vector.broadcast %cst_105 : f32 to vector<1x128xf32>
    %302 = arith.cmpf oeq, %300, %301 : vector<1x128xf32>
    %cst_106 = arith.constant 3.40282347E+38 : f32
    %303 = vector.broadcast %cst_106 : f32 to vector<1x128xf32>
    %304 = arith.select %302, %303, %300 : vector<1x128xi1>, vector<1x128xf32>
    %cst_107 = arith.constant 0xFF800000 : f32
    %305 = vector.broadcast %cst_107 : f32 to vector<1x128xf32>
    %306 = arith.cmpf oeq, %304, %305 : vector<1x128xf32>
    %cst_108 = arith.constant -3.40282347E+38 : f32
    %307 = vector.broadcast %cst_108 : f32 to vector<1x128xf32>
    %308 = arith.select %306, %307, %304 : vector<1x128xi1>, vector<1x128xf32>
    %cst_109 = arith.constant 0.000000e+00 : f32
    %309 = vector.broadcast %cst_109 : f32 to vector<1x128xf32>
    %310 = arith.select %13, %308, %309 : vector<1x128xi1>, vector<1x128xf32>
    %cst_110 = arith.constant dense<0.000000e+00> : vector<1xf32>
    %311 = vector.multi_reduction <add>, %310, %cst_110 [1] : vector<1x128xf32> to vector<1xf32>
    %312 = vector.shape_cast %311 : vector<1xf32> to vector<1x1xf32>
    %cst_111 = arith.constant 0.0416666679 : f32
    %313 = vector.broadcast %cst_111 : f32 to vector<1x1xf32>
    %314 = arith.mulf %312, %313 : vector<1x1xf32>
    %315 = vector.broadcast %314 : vector<1x1xf32> to vector<1x128xf32>
    %316 = arith.subf %310, %315 : vector<1x128xf32>
    %cst_112 = arith.constant 0.000000e+00 : f32
    %317 = vector.broadcast %cst_112 : f32 to vector<1x128xf32>
    %318 = arith.select %13, %316, %317 : vector<1x128xi1>, vector<1x128xf32>
    %319 = arith.mulf %318, %318 : vector<1x128xf32>
    %cst_113 = arith.constant dense<0.000000e+00> : vector<1xf32>
    %320 = vector.multi_reduction <add>, %319, %cst_113 [1] : vector<1x128xf32> to vector<1xf32>
    %321 = vector.shape_cast %320 : vector<1xf32> to vector<1x1xf32>
    %cst_114 = arith.constant 0.0416666679 : f32
    %322 = vector.broadcast %cst_114 : f32 to vector<1x1xf32>
    %323 = arith.mulf %321, %322 : vector<1x1xf32>
    %cst_115 = arith.constant 9.99999974E-6 : f32
    %324 = vector.broadcast %cst_115 : f32 to vector<1x1xf32>
    %325 = arith.addf %323, %324 : vector<1x1xf32>
    %326 = math.rsqrt %325 : vector<1x1xf32>
    %327 = vector.broadcast %326 : vector<1x1xf32> to vector<1x128xf32>
    %328 = arith.mulf %318, %327 : vector<1x128xf32>
    %329 = vector.shape_cast %328 : vector<1x128xf32> to vector<1x1x128xf32>
    %c0_116 = arith.constant 0 : index
    %c6 = arith.constant 6 : index
    %c0_117 = arith.constant 0 : index
    %330 = vector.load %arg6[%c0_116, %c6, %c0_117] : memref<1x25x128xf32, #tpu.memory_space<vmem>>, vector<1x1x128xf32>
    tpu.vector_store %arg6[%c0_116, %c6, %c0_117], %329 {strides = array<i32>} : memref<1x25x128xf32, #tpu.memory_space<vmem>>, vector<1x1x128xf32>,
    %cst_118 = arith.constant 0.000000e+00 : f32
    %331 = arith.cmpf one, %142, %142 : vector<1x128xf32>
    %332 = vector.broadcast %cst_118 : f32 to vector<1x128xf32>
    %333 = arith.select %331, %332, %142 : vector<1x128xi1>, vector<1x128xf32>
    %cst_119 = arith.constant 0x7F800000 : f32
    %334 = vector.broadcast %cst_119 : f32 to vector<1x128xf32>
    %335 = arith.cmpf oeq, %333, %334 : vector<1x128xf32>
    %cst_120 = arith.constant 3.40282347E+38 : f32
    %336 = vector.broadcast %cst_120 : f32 to vector<1x128xf32>
    %337 = arith.select %335, %336, %333 : vector<1x128xi1>, vector<1x128xf32>
    %cst_121 = arith.constant 0xFF800000 : f32
    %338 = vector.broadcast %cst_121 : f32 to vector<1x128xf32>
    %339 = arith.cmpf oeq, %337, %338 : vector<1x128xf32>
    %cst_122 = arith.constant -3.40282347E+38 : f32
    %340 = vector.broadcast %cst_122 : f32 to vector<1x128xf32>
    %341 = arith.select %339, %340, %337 : vector<1x128xi1>, vector<1x128xf32>
    %cst_123 = arith.constant 0.000000e+00 : f32
    %342 = vector.broadcast %cst_123 : f32 to vector<1x128xf32>
    %343 = arith.select %13, %341, %342 : vector<1x128xi1>, vector<1x128xf32>
    %cst_124 = arith.constant dense<0.000000e+00> : vector<1xf32>
    %344 = vector.multi_reduction <add>, %343, %cst_124 [1] : vector<1x128xf32> to vector<1xf32>
    %345 = vector.shape_cast %344 : vector<1xf32> to vector<1x1xf32>
    %cst_125 = arith.constant 0.0416666679 : f32
    %346 = vector.broadcast %cst_125 : f32 to vector<1x1xf32>
    %347 = arith.mulf %345, %346 : vector<1x1xf32>
    %348 = vector.broadcast %347 : vector<1x1xf32> to vector<1x128xf32>
    %349 = arith.subf %343, %348 : vector<1x128xf32>
    %cst_126 = arith.constant 0.000000e+00 : f32
    %350 = vector.broadcast %cst_126 : f32 to vector<1x128xf32>
    %351 = arith.select %13, %349, %350 : vector<1x128xi1>, vector<1x128xf32>
    %352 = arith.mulf %351, %351 : vector<1x128xf32>
    %cst_127 = arith.constant dense<0.000000e+00> : vector<1xf32>
    %353 = vector.multi_reduction <add>, %352, %cst_127 [1] : vector<1x128xf32> to vector<1xf32>
    %354 = vector.shape_cast %353 : vector<1xf32> to vector<1x1xf32>
    %cst_128 = arith.constant 0.0416666679 : f32
    %355 = vector.broadcast %cst_128 : f32 to vector<1x1xf32>
    %356 = arith.mulf %354, %355 : vector<1x1xf32>
    %cst_129 = arith.constant 9.99999974E-6 : f32
    %357 = vector.broadcast %cst_129 : f32 to vector<1x1xf32>
    %358 = arith.addf %356, %357 : vector<1x1xf32>
    %359 = math.rsqrt %358 : vector<1x1xf32>
    %360 = vector.broadcast %359 : vector<1x1xf32> to vector<1x128xf32>
    %361 = arith.mulf %351, %360 : vector<1x128xf32>
    %362 = vector.shape_cast %361 : vector<1x128xf32> to vector<1x1x128xf32>
    %c0_130 = arith.constant 0 : index
    %c7 = arith.constant 7 : index
    %c0_131 = arith.constant 0 : index
    %363 = vector.load %arg6[%c0_130, %c7, %c0_131] : memref<1x25x128xf32, #tpu.memory_space<vmem>>, vector<1x1x128xf32>
    tpu.vector_store %arg6[%c0_130, %c7, %c0_131], %362 {strides = array<i32>} : memref<1x25x128xf32, #tpu.memory_space<vmem>>, vector<1x1x128xf32>,
    %cst_132 = arith.constant 0.000000e+00 : f32
    %364 = arith.cmpf one, %145, %145 : vector<1x128xf32>
    %365 = vector.broadcast %cst_132 : f32 to vector<1x128xf32>
    %366 = arith.select %364, %365, %145 : vector<1x128xi1>, vector<1x128xf32>
    %cst_133 = arith.constant 0x7F800000 : f32
    %367 = vector.broadcast %cst_133 : f32 to vector<1x128xf32>
    %368 = arith.cmpf oeq, %366, %367 : vector<1x128xf32>
    %cst_134 = arith.constant 3.40282347E+38 : f32
    %369 = vector.broadcast %cst_134 : f32 to vector<1x128xf32>
    %370 = arith.select %368, %369, %366 : vector<1x128xi1>, vector<1x128xf32>
    %cst_135 = arith.constant 0xFF800000 : f32
    %371 = vector.broadcast %cst_135 : f32 to vector<1x128xf32>
    %372 = arith.cmpf oeq, %370, %371 : vector<1x128xf32>
    %cst_136 = arith.constant -3.40282347E+38 : f32
    %373 = vector.broadcast %cst_136 : f32 to vector<1x128xf32>
    %374 = arith.select %372, %373, %370 : vector<1x128xi1>, vector<1x128xf32>
    %cst_137 = arith.constant 0.000000e+00 : f32
    %375 = vector.broadcast %cst_137 : f32 to vector<1x128xf32>
    %376 = arith.select %13, %374, %375 : vector<1x128xi1>, vector<1x128xf32>
    %cst_138 = arith.constant dense<0.000000e+00> : vector<1xf32>
    %377 = vector.multi_reduction <add>, %376, %cst_138 [1] : vector<1x128xf32> to vector<1xf32>
    %378 = vector.shape_cast %377 : vector<1xf32> to vector<1x1xf32>
    %cst_139 = arith.constant 0.0416666679 : f32
    %379 = vector.broadcast %cst_139 : f32 to vector<1x1xf32>
    %380 = arith.mulf %378, %379 : vector<1x1xf32>
    %381 = vector.broadcast %380 : vector<1x1xf32> to vector<1x128xf32>
    %382 = arith.subf %376, %381 : vector<1x128xf32>
    %cst_140 = arith.constant 0.000000e+00 : f32
    %383 = vector.broadcast %cst_140 : f32 to vector<1x128xf32>
    %384 = arith.select %13, %382, %383 : vector<1x128xi1>, vector<1x128xf32>
    %385 = arith.mulf %384, %384 : vector<1x128xf32>
    %cst_141 = arith.constant dense<0.000000e+00> : vector<1xf32>
    %386 = vector.multi_reduction <add>, %385, %cst_141 [1] : vector<1x128xf32> to vector<1xf32>
    %387 = vector.shape_cast %386 : vector<1xf32> to vector<1x1xf32>
    %cst_142 = arith.constant 0.0416666679 : f32
    %388 = vector.broadcast %cst_142 : f32 to vector<1x1xf32>
    %389 = arith.mulf %387, %388 : vector<1x1xf32>
    %cst_143 = arith.constant 9.99999974E-6 : f32
    %390 = vector.broadcast %cst_143 : f32 to vector<1x1xf32>
    %391 = arith.addf %389, %390 : vector<1x1xf32>
    %392 = math.rsqrt %391 : vector<1x1xf32>
    %393 = vector.broadcast %392 : vector<1x1xf32> to vector<1x128xf32>
    %394 = arith.mulf %384, %393 : vector<1x128xf32>
    %395 = vector.shape_cast %394 : vector<1x128xf32> to vector<1x1x128xf32>
    %c0_144 = arith.constant 0 : index
    %c8 = arith.constant 8 : index
    %c0_145 = arith.constant 0 : index
    %396 = vector.load %arg6[%c0_144, %c8, %c0_145] : memref<1x25x128xf32, #tpu.memory_space<vmem>>, vector<1x1x128xf32>
    tpu.vector_store %arg6[%c0_144, %c8, %c0_145], %395 {strides = array<i32>} : memref<1x25x128xf32, #tpu.memory_space<vmem>>, vector<1x1x128xf32>,
    %397 = arith.mulf %76, %134 : vector<1x128xf32>
    %cst_146 = arith.constant 0.000000e+00 : f32
    %398 = arith.cmpf one, %397, %397 : vector<1x128xf32>
    %399 = vector.broadcast %cst_146 : f32 to vector<1x128xf32>
    %400 = arith.select %398, %399, %397 : vector<1x128xi1>, vector<1x128xf32>
    %cst_147 = arith.constant 0x7F800000 : f32
    %401 = vector.broadcast %cst_147 : f32 to vector<1x128xf32>
    %402 = arith.cmpf oeq, %400, %401 : vector<1x128xf32>
    %cst_148 = arith.constant 3.40282347E+38 : f32
    %403 = vector.broadcast %cst_148 : f32 to vector<1x128xf32>
    %404 = arith.select %402, %403, %400 : vector<1x128xi1>, vector<1x128xf32>
    %cst_149 = arith.constant 0xFF800000 : f32
    %405 = vector.broadcast %cst_149 : f32 to vector<1x128xf32>
    %406 = arith.cmpf oeq, %404, %405 : vector<1x128xf32>
    %cst_150 = arith.constant -3.40282347E+38 : f32
    %407 = vector.broadcast %cst_150 : f32 to vector<1x128xf32>
    %408 = arith.select %406, %407, %404 : vector<1x128xi1>, vector<1x128xf32>
    %cst_151 = arith.constant 0.000000e+00 : f32
    %409 = vector.broadcast %cst_151 : f32 to vector<1x128xf32>
    %410 = arith.select %13, %408, %409 : vector<1x128xi1>, vector<1x128xf32>
    %cst_152 = arith.constant dense<0.000000e+00> : vector<1xf32>
    %411 = vector.multi_reduction <add>, %410, %cst_152 [1] : vector<1x128xf32> to vector<1xf32>
    %412 = vector.shape_cast %411 : vector<1xf32> to vector<1x1xf32>
    %cst_153 = arith.constant 0.0416666679 : f32
    %413 = vector.broadcast %cst_153 : f32 to vector<1x1xf32>
    %414 = arith.mulf %412, %413 : vector<1x1xf32>
    %415 = vector.broadcast %414 : vector<1x1xf32> to vector<1x128xf32>
    %416 = arith.subf %410, %415 : vector<1x128xf32>
    %cst_154 = arith.constant 0.000000e+00 : f32
    %417 = vector.broadcast %cst_154 : f32 to vector<1x128xf32>
    %418 = arith.select %13, %416, %417 : vector<1x128xi1>, vector<1x128xf32>
    %419 = arith.mulf %418, %418 : vector<1x128xf32>
    %cst_155 = arith.constant dense<0.000000e+00> : vector<1xf32>
    %420 = vector.multi_reduction <add>, %419, %cst_155 [1] : vector<1x128xf32> to vector<1xf32>
    %421 = vector.shape_cast %420 : vector<1xf32> to vector<1x1xf32>
    %cst_156 = arith.constant 0.0416666679 : f32
    %422 = vector.broadcast %cst_156 : f32 to vector<1x1xf32>
    %423 = arith.mulf %421, %422 : vector<1x1xf32>
    %cst_157 = arith.constant 9.99999974E-6 : f32
    %424 = vector.broadcast %cst_157 : f32 to vector<1x1xf32>
    %425 = arith.addf %423, %424 : vector<1x1xf32>
    %426 = math.rsqrt %425 : vector<1x1xf32>
    %427 = vector.broadcast %426 : vector<1x1xf32> to vector<1x128xf32>
    %428 = arith.mulf %418, %427 : vector<1x128xf32>
    %429 = vector.shape_cast %428 : vector<1x128xf32> to vector<1x1x128xf32>
    %c0_158 = arith.constant 0 : index
    %c9 = arith.constant 9 : index
    %c0_159 = arith.constant 0 : index
    %430 = vector.load %arg6[%c0_158, %c9, %c0_159] : memref<1x25x128xf32, #tpu.memory_space<vmem>>, vector<1x1x128xf32>
    tpu.vector_store %arg6[%c0_158, %c9, %c0_159], %429 {strides = array<i32>} : memref<1x25x128xf32, #tpu.memory_space<vmem>>, vector<1x1x128xf32>,
    %431 = arith.mulf %79, %134 : vector<1x128xf32>
    %cst_160 = arith.constant 0.000000e+00 : f32
    %432 = arith.cmpf one, %431, %431 : vector<1x128xf32>
    %433 = vector.broadcast %cst_160 : f32 to vector<1x128xf32>
    %434 = arith.select %432, %433, %431 : vector<1x128xi1>, vector<1x128xf32>
    %cst_161 = arith.constant 0x7F800000 : f32
    %435 = vector.broadcast %cst_161 : f32 to vector<1x128xf32>
    %436 = arith.cmpf oeq, %434, %435 : vector<1x128xf32>
    %cst_162 = arith.constant 3.40282347E+38 : f32
    %437 = vector.broadcast %cst_162 : f32 to vector<1x128xf32>
    %438 = arith.select %436, %437, %434 : vector<1x128xi1>, vector<1x128xf32>
    %cst_163 = arith.constant 0xFF800000 : f32
    %439 = vector.broadcast %cst_163 : f32 to vector<1x128xf32>
    %440 = arith.cmpf oeq, %438, %439 : vector<1x128xf32>
    %cst_164 = arith.constant -3.40282347E+38 : f32
    %441 = vector.broadcast %cst_164 : f32 to vector<1x128xf32>
    %442 = arith.select %440, %441, %438 : vector<1x128xi1>, vector<1x128xf32>
    %cst_165 = arith.constant 0.000000e+00 : f32
    %443 = vector.broadcast %cst_165 : f32 to vector<1x128xf32>
    %444 = arith.select %13, %442, %443 : vector<1x128xi1>, vector<1x128xf32>
    %cst_166 = arith.constant dense<0.000000e+00> : vector<1xf32>
    %445 = vector.multi_reduction <add>, %444, %cst_166 [1] : vector<1x128xf32> to vector<1xf32>
    %446 = vector.shape_cast %445 : vector<1xf32> to vector<1x1xf32>
    %cst_167 = arith.constant 0.0416666679 : f32
    %447 = vector.broadcast %cst_167 : f32 to vector<1x1xf32>
    %448 = arith.mulf %446, %447 : vector<1x1xf32>
    %449 = vector.broadcast %448 : vector<1x1xf32> to vector<1x128xf32>
    %450 = arith.subf %444, %449 : vector<1x128xf32>
    %cst_168 = arith.constant 0.000000e+00 : f32
    %451 = vector.broadcast %cst_168 : f32 to vector<1x128xf32>
    %452 = arith.select %13, %450, %451 : vector<1x128xi1>, vector<1x128xf32>
    %453 = arith.mulf %452, %452 : vector<1x128xf32>
    %cst_169 = arith.constant dense<0.000000e+00> : vector<1xf32>
    %454 = vector.multi_reduction <add>, %453, %cst_169 [1] : vector<1x128xf32> to vector<1xf32>
    %455 = vector.shape_cast %454 : vector<1xf32> to vector<1x1xf32>
    %cst_170 = arith.constant 0.0416666679 : f32
    %456 = vector.broadcast %cst_170 : f32 to vector<1x1xf32>
    %457 = arith.mulf %455, %456 : vector<1x1xf32>
    %cst_171 = arith.constant 9.99999974E-6 : f32
    %458 = vector.broadcast %cst_171 : f32 to vector<1x1xf32>
    %459 = arith.addf %457, %458 : vector<1x1xf32>
    %460 = math.rsqrt %459 : vector<1x1xf32>
    %461 = vector.broadcast %460 : vector<1x1xf32> to vector<1x128xf32>
    %462 = arith.mulf %452, %461 : vector<1x128xf32>
    %463 = vector.shape_cast %462 : vector<1x128xf32> to vector<1x1x128xf32>
    %c0_172 = arith.constant 0 : index
    %c10 = arith.constant 10 : index
    %c0_173 = arith.constant 0 : index
    %464 = vector.load %arg6[%c0_172, %c10, %c0_173] : memref<1x25x128xf32, #tpu.memory_space<vmem>>, vector<1x1x128xf32>
    tpu.vector_store %arg6[%c0_172, %c10, %c0_173], %463 {strides = array<i32>} : memref<1x25x128xf32, #tpu.memory_space<vmem>>, vector<1x1x128xf32>,
    %465 = arith.mulf %82, %134 : vector<1x128xf32>
    %cst_174 = arith.constant 0.000000e+00 : f32
    %466 = arith.cmpf one, %465, %465 : vector<1x128xf32>
    %467 = vector.broadcast %cst_174 : f32 to vector<1x128xf32>
    %468 = arith.select %466, %467, %465 : vector<1x128xi1>, vector<1x128xf32>
    %cst_175 = arith.constant 0x7F800000 : f32
    %469 = vector.broadcast %cst_175 : f32 to vector<1x128xf32>
    %470 = arith.cmpf oeq, %468, %469 : vector<1x128xf32>
    %cst_176 = arith.constant 3.40282347E+38 : f32
    %471 = vector.broadcast %cst_176 : f32 to vector<1x128xf32>
    %472 = arith.select %470, %471, %468 : vector<1x128xi1>, vector<1x128xf32>
    %cst_177 = arith.constant 0xFF800000 : f32
    %473 = vector.broadcast %cst_177 : f32 to vector<1x128xf32>
    %474 = arith.cmpf oeq, %472, %473 : vector<1x128xf32>
    %cst_178 = arith.constant -3.40282347E+38 : f32
    %475 = vector.broadcast %cst_178 : f32 to vector<1x128xf32>
    %476 = arith.select %474, %475, %472 : vector<1x128xi1>, vector<1x128xf32>
    %cst_179 = arith.constant 0.000000e+00 : f32
    %477 = vector.broadcast %cst_179 : f32 to vector<1x128xf32>
    %478 = arith.select %13, %476, %477 : vector<1x128xi1>, vector<1x128xf32>
    %cst_180 = arith.constant dense<0.000000e+00> : vector<1xf32>
    %479 = vector.multi_reduction <add>, %478, %cst_180 [1] : vector<1x128xf32> to vector<1xf32>
    %480 = vector.shape_cast %479 : vector<1xf32> to vector<1x1xf32>
    %cst_181 = arith.constant 0.0416666679 : f32
    %481 = vector.broadcast %cst_181 : f32 to vector<1x1xf32>
    %482 = arith.mulf %480, %481 : vector<1x1xf32>
    %483 = vector.broadcast %482 : vector<1x1xf32> to vector<1x128xf32>
    %484 = arith.subf %478, %483 : vector<1x128xf32>
    %cst_182 = arith.constant 0.000000e+00 : f32
    %485 = vector.broadcast %cst_182 : f32 to vector<1x128xf32>
    %486 = arith.select %13, %484, %485 : vector<1x128xi1>, vector<1x128xf32>
    %487 = arith.mulf %486, %486 : vector<1x128xf32>
    %cst_183 = arith.constant dense<0.000000e+00> : vector<1xf32>
    %488 = vector.multi_reduction <add>, %487, %cst_183 [1] : vector<1x128xf32> to vector<1xf32>
    %489 = vector.shape_cast %488 : vector<1xf32> to vector<1x1xf32>
    %cst_184 = arith.constant 0.0416666679 : f32
    %490 = vector.broadcast %cst_184 : f32 to vector<1x1xf32>
    %491 = arith.mulf %489, %490 : vector<1x1xf32>
    %cst_185 = arith.constant 9.99999974E-6 : f32
    %492 = vector.broadcast %cst_185 : f32 to vector<1x1xf32>
    %493 = arith.addf %491, %492 : vector<1x1xf32>
    %494 = math.rsqrt %493 : vector<1x1xf32>
    %495 = vector.broadcast %494 : vector<1x1xf32> to vector<1x128xf32>
    %496 = arith.mulf %486, %495 : vector<1x128xf32>
    %497 = vector.shape_cast %496 : vector<1x128xf32> to vector<1x1x128xf32>
    %c0_186 = arith.constant 0 : index
    %c11 = arith.constant 11 : index
    %c0_187 = arith.constant 0 : index
    %498 = vector.load %arg6[%c0_186, %c11, %c0_187] : memref<1x25x128xf32, #tpu.memory_space<vmem>>, vector<1x1x128xf32>
    tpu.vector_store %arg6[%c0_186, %c11, %c0_187], %497 {strides = array<i32>} : memref<1x25x128xf32, #tpu.memory_space<vmem>>, vector<1x1x128xf32>,
    %499 = arith.mulf %85, %134 : vector<1x128xf32>
    %cst_188 = arith.constant 0.000000e+00 : f32
    %500 = arith.cmpf one, %499, %499 : vector<1x128xf32>
    %501 = vector.broadcast %cst_188 : f32 to vector<1x128xf32>
    %502 = arith.select %500, %501, %499 : vector<1x128xi1>, vector<1x128xf32>
    %cst_189 = arith.constant 0x7F800000 : f32
    %503 = vector.broadcast %cst_189 : f32 to vector<1x128xf32>
    %504 = arith.cmpf oeq, %502, %503 : vector<1x128xf32>
    %cst_190 = arith.constant 3.40282347E+38 : f32
    %505 = vector.broadcast %cst_190 : f32 to vector<1x128xf32>
    %506 = arith.select %504, %505, %502 : vector<1x128xi1>, vector<1x128xf32>
    %cst_191 = arith.constant 0xFF800000 : f32
    %507 = vector.broadcast %cst_191 : f32 to vector<1x128xf32>
    %508 = arith.cmpf oeq, %506, %507 : vector<1x128xf32>
    %cst_192 = arith.constant -3.40282347E+38 : f32
    %509 = vector.broadcast %cst_192 : f32 to vector<1x128xf32>
    %510 = arith.select %508, %509, %506 : vector<1x128xi1>, vector<1x128xf32>
    %cst_193 = arith.constant 0.000000e+00 : f32
    %511 = vector.broadcast %cst_193 : f32 to vector<1x128xf32>
    %512 = arith.select %13, %510, %511 : vector<1x128xi1>, vector<1x128xf32>
    %cst_194 = arith.constant dense<0.000000e+00> : vector<1xf32>
    %513 = vector.multi_reduction <add>, %512, %cst_194 [1] : vector<1x128xf32> to vector<1xf32>
    %514 = vector.shape_cast %513 : vector<1xf32> to vector<1x1xf32>
    %cst_195 = arith.constant 0.0416666679 : f32
    %515 = vector.broadcast %cst_195 : f32 to vector<1x1xf32>
    %516 = arith.mulf %514, %515 : vector<1x1xf32>
    %517 = vector.broadcast %516 : vector<1x1xf32> to vector<1x128xf32>
    %518 = arith.subf %512, %517 : vector<1x128xf32>
    %cst_196 = arith.constant 0.000000e+00 : f32
    %519 = vector.broadcast %cst_196 : f32 to vector<1x128xf32>
    %520 = arith.select %13, %518, %519 : vector<1x128xi1>, vector<1x128xf32>
    %521 = arith.mulf %520, %520 : vector<1x128xf32>
    %cst_197 = arith.constant dense<0.000000e+00> : vector<1xf32>
    %522 = vector.multi_reduction <add>, %521, %cst_197 [1] : vector<1x128xf32> to vector<1xf32>
    %523 = vector.shape_cast %522 : vector<1xf32> to vector<1x1xf32>
    %cst_198 = arith.constant 0.0416666679 : f32
    %524 = vector.broadcast %cst_198 : f32 to vector<1x1xf32>
    %525 = arith.mulf %523, %524 : vector<1x1xf32>
    %cst_199 = arith.constant 9.99999974E-6 : f32
    %526 = vector.broadcast %cst_199 : f32 to vector<1x1xf32>
    %527 = arith.addf %525, %526 : vector<1x1xf32>
    %528 = math.rsqrt %527 : vector<1x1xf32>
    %529 = vector.broadcast %528 : vector<1x1xf32> to vector<1x128xf32>
    %530 = arith.mulf %520, %529 : vector<1x128xf32>
    %531 = vector.shape_cast %530 : vector<1x128xf32> to vector<1x1x128xf32>
    %c0_200 = arith.constant 0 : index
    %c12 = arith.constant 12 : index
    %c0_201 = arith.constant 0 : index
    %532 = vector.load %arg6[%c0_200, %c12, %c0_201] : memref<1x25x128xf32, #tpu.memory_space<vmem>>, vector<1x1x128xf32>
    tpu.vector_store %arg6[%c0_200, %c12, %c0_201], %531 {strides = array<i32>} : memref<1x25x128xf32, #tpu.memory_space<vmem>>, vector<1x1x128xf32>,
    %533 = arith.mulf %88, %137 : vector<1x128xf32>
    %cst_202 = arith.constant 0.000000e+00 : f32
    %534 = arith.cmpf one, %533, %533 : vector<1x128xf32>
    %535 = vector.broadcast %cst_202 : f32 to vector<1x128xf32>
    %536 = arith.select %534, %535, %533 : vector<1x128xi1>, vector<1x128xf32>
    %cst_203 = arith.constant 0x7F800000 : f32
    %537 = vector.broadcast %cst_203 : f32 to vector<1x128xf32>
    %538 = arith.cmpf oeq, %536, %537 : vector<1x128xf32>
    %cst_204 = arith.constant 3.40282347E+38 : f32
    %539 = vector.broadcast %cst_204 : f32 to vector<1x128xf32>
    %540 = arith.select %538, %539, %536 : vector<1x128xi1>, vector<1x128xf32>
    %cst_205 = arith.constant 0xFF800000 : f32
    %541 = vector.broadcast %cst_205 : f32 to vector<1x128xf32>
    %542 = arith.cmpf oeq, %540, %541 : vector<1x128xf32>
    %cst_206 = arith.constant -3.40282347E+38 : f32
    %543 = vector.broadcast %cst_206 : f32 to vector<1x128xf32>
    %544 = arith.select %542, %543, %540 : vector<1x128xi1>, vector<1x128xf32>
    %cst_207 = arith.constant 0.000000e+00 : f32
    %545 = vector.broadcast %cst_207 : f32 to vector<1x128xf32>
    %546 = arith.select %13, %544, %545 : vector<1x128xi1>, vector<1x128xf32>
    %cst_208 = arith.constant dense<0.000000e+00> : vector<1xf32>
    %547 = vector.multi_reduction <add>, %546, %cst_208 [1] : vector<1x128xf32> to vector<1xf32>
    %548 = vector.shape_cast %547 : vector<1xf32> to vector<1x1xf32>
    %cst_209 = arith.constant 0.0416666679 : f32
    %549 = vector.broadcast %cst_209 : f32 to vector<1x1xf32>
    %550 = arith.mulf %548, %549 : vector<1x1xf32>
    %551 = vector.broadcast %550 : vector<1x1xf32> to vector<1x128xf32>
    %552 = arith.subf %546, %551 : vector<1x128xf32>
    %cst_210 = arith.constant 0.000000e+00 : f32
    %553 = vector.broadcast %cst_210 : f32 to vector<1x128xf32>
    %554 = arith.select %13, %552, %553 : vector<1x128xi1>, vector<1x128xf32>
    %555 = arith.mulf %554, %554 : vector<1x128xf32>
    %cst_211 = arith.constant dense<0.000000e+00> : vector<1xf32>
    %556 = vector.multi_reduction <add>, %555, %cst_211 [1] : vector<1x128xf32> to vector<1xf32>
    %557 = vector.shape_cast %556 : vector<1xf32> to vector<1x1xf32>
    %cst_212 = arith.constant 0.0416666679 : f32
    %558 = vector.broadcast %cst_212 : f32 to vector<1x1xf32>
    %559 = arith.mulf %557, %558 : vector<1x1xf32>
    %cst_213 = arith.constant 9.99999974E-6 : f32
    %560 = vector.broadcast %cst_213 : f32 to vector<1x1xf32>
    %561 = arith.addf %559, %560 : vector<1x1xf32>
    %562 = math.rsqrt %561 : vector<1x1xf32>
    %563 = vector.broadcast %562 : vector<1x1xf32> to vector<1x128xf32>
    %564 = arith.mulf %554, %563 : vector<1x128xf32>
    %565 = vector.shape_cast %564 : vector<1x128xf32> to vector<1x1x128xf32>
    %c0_214 = arith.constant 0 : index
    %c13 = arith.constant 13 : index
    %c0_215 = arith.constant 0 : index
    %566 = vector.load %arg6[%c0_214, %c13, %c0_215] : memref<1x25x128xf32, #tpu.memory_space<vmem>>, vector<1x1x128xf32>
    tpu.vector_store %arg6[%c0_214, %c13, %c0_215], %565 {strides = array<i32>} : memref<1x25x128xf32, #tpu.memory_space<vmem>>, vector<1x1x128xf32>,
    %567 = arith.mulf %91, %137 : vector<1x128xf32>
    %cst_216 = arith.constant 0.000000e+00 : f32
    %568 = arith.cmpf one, %567, %567 : vector<1x128xf32>
    %569 = vector.broadcast %cst_216 : f32 to vector<1x128xf32>
    %570 = arith.select %568, %569, %567 : vector<1x128xi1>, vector<1x128xf32>
    %cst_217 = arith.constant 0x7F800000 : f32
    %571 = vector.broadcast %cst_217 : f32 to vector<1x128xf32>
    %572 = arith.cmpf oeq, %570, %571 : vector<1x128xf32>
    %cst_218 = arith.constant 3.40282347E+38 : f32
    %573 = vector.broadcast %cst_218 : f32 to vector<1x128xf32>
    %574 = arith.select %572, %573, %570 : vector<1x128xi1>, vector<1x128xf32>
    %cst_219 = arith.constant 0xFF800000 : f32
    %575 = vector.broadcast %cst_219 : f32 to vector<1x128xf32>
    %576 = arith.cmpf oeq, %574, %575 : vector<1x128xf32>
    %cst_220 = arith.constant -3.40282347E+38 : f32
    %577 = vector.broadcast %cst_220 : f32 to vector<1x128xf32>
    %578 = arith.select %576, %577, %574 : vector<1x128xi1>, vector<1x128xf32>
    %cst_221 = arith.constant 0.000000e+00 : f32
    %579 = vector.broadcast %cst_221 : f32 to vector<1x128xf32>
    %580 = arith.select %13, %578, %579 : vector<1x128xi1>, vector<1x128xf32>
    %cst_222 = arith.constant dense<0.000000e+00> : vector<1xf32>
    %581 = vector.multi_reduction <add>, %580, %cst_222 [1] : vector<1x128xf32> to vector<1xf32>
    %582 = vector.shape_cast %581 : vector<1xf32> to vector<1x1xf32>
    %cst_223 = arith.constant 0.0416666679 : f32
    %583 = vector.broadcast %cst_223 : f32 to vector<1x1xf32>
    %584 = arith.mulf %582, %583 : vector<1x1xf32>
    %585 = vector.broadcast %584 : vector<1x1xf32> to vector<1x128xf32>
    %586 = arith.subf %580, %585 : vector<1x128xf32>
    %cst_224 = arith.constant 0.000000e+00 : f32
    %587 = vector.broadcast %cst_224 : f32 to vector<1x128xf32>
    %588 = arith.select %13, %586, %587 : vector<1x128xi1>, vector<1x128xf32>
    %589 = arith.mulf %588, %588 : vector<1x128xf32>
    %cst_225 = arith.constant dense<0.000000e+00> : vector<1xf32>
    %590 = vector.multi_reduction <add>, %589, %cst_225 [1] : vector<1x128xf32> to vector<1xf32>
    %591 = vector.shape_cast %590 : vector<1xf32> to vector<1x1xf32>
    %cst_226 = arith.constant 0.0416666679 : f32
    %592 = vector.broadcast %cst_226 : f32 to vector<1x1xf32>
    %593 = arith.mulf %591, %592 : vector<1x1xf32>
    %cst_227 = arith.constant 9.99999974E-6 : f32
    %594 = vector.broadcast %cst_227 : f32 to vector<1x1xf32>
    %595 = arith.addf %593, %594 : vector<1x1xf32>
    %596 = math.rsqrt %595 : vector<1x1xf32>
    %597 = vector.broadcast %596 : vector<1x1xf32> to vector<1x128xf32>
    %598 = arith.mulf %588, %597 : vector<1x128xf32>
    %599 = vector.shape_cast %598 : vector<1x128xf32> to vector<1x1x128xf32>
    %c0_228 = arith.constant 0 : index
    %c14 = arith.constant 14 : index
    %c0_229 = arith.constant 0 : index
    %600 = vector.load %arg6[%c0_228, %c14, %c0_229] : memref<1x25x128xf32, #tpu.memory_space<vmem>>, vector<1x1x128xf32>
    tpu.vector_store %arg6[%c0_228, %c14, %c0_229], %599 {strides = array<i32>} : memref<1x25x128xf32, #tpu.memory_space<vmem>>, vector<1x1x128xf32>,
    %601 = math.log1p %10 : vector<1x128xf32>
    %cst_230 = arith.constant 0.000000e+00 : f32
    %602 = arith.cmpf one, %601, %601 : vector<1x128xf32>
    %603 = vector.broadcast %cst_230 : f32 to vector<1x128xf32>
    %604 = arith.select %602, %603, %601 : vector<1x128xi1>, vector<1x128xf32>
    %cst_231 = arith.constant 0x7F800000 : f32
    %605 = vector.broadcast %cst_231 : f32 to vector<1x128xf32>
    %606 = arith.cmpf oeq, %604, %605 : vector<1x128xf32>
    %cst_232 = arith.constant 3.40282347E+38 : f32
    %607 = vector.broadcast %cst_232 : f32 to vector<1x128xf32>
    %608 = arith.select %606, %607, %604 : vector<1x128xi1>, vector<1x128xf32>
    %cst_233 = arith.constant 0xFF800000 : f32
    %609 = vector.broadcast %cst_233 : f32 to vector<1x128xf32>
    %610 = arith.cmpf oeq, %608, %609 : vector<1x128xf32>
    %cst_234 = arith.constant -3.40282347E+38 : f32
    %611 = vector.broadcast %cst_234 : f32 to vector<1x128xf32>
    %612 = arith.select %610, %611, %608 : vector<1x128xi1>, vector<1x128xf32>
    %cst_235 = arith.constant 0.000000e+00 : f32
    %613 = vector.broadcast %cst_235 : f32 to vector<1x128xf32>
    %614 = arith.select %13, %612, %613 : vector<1x128xi1>, vector<1x128xf32>
    %cst_236 = arith.constant dense<0.000000e+00> : vector<1xf32>
    %615 = vector.multi_reduction <add>, %614, %cst_236 [1] : vector<1x128xf32> to vector<1xf32>
    %616 = vector.shape_cast %615 : vector<1xf32> to vector<1x1xf32>
    %cst_237 = arith.constant 0.0416666679 : f32
    %617 = vector.broadcast %cst_237 : f32 to vector<1x1xf32>
    %618 = arith.mulf %616, %617 : vector<1x1xf32>
    %619 = vector.broadcast %618 : vector<1x1xf32> to vector<1x128xf32>
    %620 = arith.subf %614, %619 : vector<1x128xf32>
    %cst_238 = arith.constant 0.000000e+00 : f32
    %621 = vector.broadcast %cst_238 : f32 to vector<1x128xf32>
    %622 = arith.select %13, %620, %621 : vector<1x128xi1>, vector<1x128xf32>
    %623 = arith.mulf %622, %622 : vector<1x128xf32>
    %cst_239 = arith.constant dense<0.000000e+00> : vector<1xf32>
    %624 = vector.multi_reduction <add>, %623, %cst_239 [1] : vector<1x128xf32> to vector<1xf32>
    %625 = vector.shape_cast %624 : vector<1xf32> to vector<1x1xf32>
    %cst_240 = arith.constant 0.0416666679 : f32
    %626 = vector.broadcast %cst_240 : f32 to vector<1x1xf32>
    %627 = arith.mulf %625, %626 : vector<1x1xf32>
    %cst_241 = arith.constant 9.99999974E-6 : f32
    %628 = vector.broadcast %cst_241 : f32 to vector<1x1xf32>
    %629 = arith.addf %627, %628 : vector<1x1xf32>
    %630 = math.rsqrt %629 : vector<1x1xf32>
    %631 = vector.broadcast %630 : vector<1x1xf32> to vector<1x128xf32>
    %632 = arith.mulf %622, %631 : vector<1x128xf32>
    %633 = vector.shape_cast %632 : vector<1x128xf32> to vector<1x1x128xf32>
    %c0_242 = arith.constant 0 : index
    %c15 = arith.constant 15 : index
    %c0_243 = arith.constant 0 : index
    %634 = vector.load %arg6[%c0_242, %c15, %c0_243] : memref<1x25x128xf32, #tpu.memory_space<vmem>>, vector<1x1x128xf32>
    tpu.vector_store %arg6[%c0_242, %c15, %c0_243], %633 {strides = array<i32>} : memref<1x25x128xf32, #tpu.memory_space<vmem>>, vector<1x1x128xf32>,
    %cst_244 = arith.constant 0.000000e+00 : f32
    %635 = vector.broadcast %cst_244 : f32 to vector<1x128xf32>
    %636 = arith.select %13, %146, %635 : vector<1x128xi1>, vector<1x128xf32>
    %cst_245 = arith.constant dense<0.000000e+00> : vector<1xf32>
    %637 = vector.multi_reduction <add>, %636, %cst_245 [1] : vector<1x128xf32> to vector<1xf32>
    %638 = vector.shape_cast %637 : vector<1xf32> to vector<1x1xf32>
    %cst_246 = arith.constant 0.0416666679 : f32
    %639 = vector.broadcast %cst_246 : f32 to vector<1x1xf32>
    %640 = arith.mulf %638, %639 : vector<1x1xf32>
    %641 = vector.broadcast %640 : vector<1x1xf32> to vector<1x128xf32>
    %642 = arith.subf %636, %641 : vector<1x128xf32>
    %cst_247 = arith.constant 0.000000e+00 : f32
    %643 = vector.broadcast %cst_247 : f32 to vector<1x128xf32>
    %644 = arith.select %13, %642, %643 : vector<1x128xi1>, vector<1x128xf32>
    %645 = arith.mulf %644, %644 : vector<1x128xf32>
    %cst_248 = arith.constant dense<0.000000e+00> : vector<1xf32>
    %646 = vector.multi_reduction <add>, %645, %cst_248 [1] : vector<1x128xf32> to vector<1xf32>
    %647 = vector.shape_cast %646 : vector<1xf32> to vector<1x1xf32>
    %cst_249 = arith.constant 0.0416666679 : f32
    %648 = vector.broadcast %cst_249 : f32 to vector<1x1xf32>
    %649 = arith.mulf %647, %648 : vector<1x1xf32>
    %cst_250 = arith.constant 9.99999974E-6 : f32
    %650 = vector.broadcast %cst_250 : f32 to vector<1x1xf32>
    %651 = arith.addf %649, %650 : vector<1x1xf32>
    %652 = math.rsqrt %651 : vector<1x1xf32>
    %653 = vector.broadcast %652 : vector<1x1xf32> to vector<1x128xf32>
    %654 = arith.mulf %644, %653 : vector<1x128xf32>
    %655 = vector.shape_cast %654 : vector<1x128xf32> to vector<1x1x128xf32>
    %c0_251 = arith.constant 0 : index
    %c16 = arith.constant 16 : index
    %c0_252 = arith.constant 0 : index
    %656 = vector.load %arg6[%c0_251, %c16, %c0_252] : memref<1x25x128xf32, #tpu.memory_space<vmem>>, vector<1x1x128xf32>
    tpu.vector_store %arg6[%c0_251, %c16, %c0_252], %655 {strides = array<i32>} : memref<1x25x128xf32, #tpu.memory_space<vmem>>, vector<1x1x128xf32>,
    %cst_253 = arith.constant 0.000000e+00 : f32
    %657 = vector.broadcast %cst_253 : f32 to vector<1x128xf32>
    %658 = arith.select %13, %147, %657 : vector<1x128xi1>, vector<1x128xf32>
    %cst_254 = arith.constant dense<0.000000e+00> : vector<1xf32>
    %659 = vector.multi_reduction <add>, %658, %cst_254 [1] : vector<1x128xf32> to vector<1xf32>
    %660 = vector.shape_cast %659 : vector<1xf32> to vector<1x1xf32>
    %cst_255 = arith.constant 0.0416666679 : f32
    %661 = vector.broadcast %cst_255 : f32 to vector<1x1xf32>
    %662 = arith.mulf %660, %661 : vector<1x1xf32>
    %663 = vector.broadcast %662 : vector<1x1xf32> to vector<1x128xf32>
    %664 = arith.subf %658, %663 : vector<1x128xf32>
    %cst_256 = arith.constant 0.000000e+00 : f32
    %665 = vector.broadcast %cst_256 : f32 to vector<1x128xf32>
    %666 = arith.select %13, %664, %665 : vector<1x128xi1>, vector<1x128xf32>
    %667 = arith.mulf %666, %666 : vector<1x128xf32>
    %cst_257 = arith.constant dense<0.000000e+00> : vector<1xf32>
    %668 = vector.multi_reduction <add>, %667, %cst_257 [1] : vector<1x128xf32> to vector<1xf32>
    %669 = vector.shape_cast %668 : vector<1xf32> to vector<1x1xf32>
    %cst_258 = arith.constant 0.0416666679 : f32
    %670 = vector.broadcast %cst_258 : f32 to vector<1x1xf32>
    %671 = arith.mulf %669, %670 : vector<1x1xf32>
    %cst_259 = arith.constant 9.99999974E-6 : f32
    %672 = vector.broadcast %cst_259 : f32 to vector<1x1xf32>
    %673 = arith.addf %671, %672 : vector<1x1xf32>
    %674 = math.rsqrt %673 : vector<1x1xf32>
    %675 = vector.broadcast %674 : vector<1x1xf32> to vector<1x128xf32>
    %676 = arith.mulf %666, %675 : vector<1x128xf32>
    %677 = vector.shape_cast %676 : vector<1x128xf32> to vector<1x1x128xf32>
    %c0_260 = arith.constant 0 : index
    %c17 = arith.constant 17 : index
    %c0_261 = arith.constant 0 : index
    %678 = vector.load %arg6[%c0_260, %c17, %c0_261] : memref<1x25x128xf32, #tpu.memory_space<vmem>>, vector<1x1x128xf32>
    tpu.vector_store %arg6[%c0_260, %c17, %c0_261], %677 {strides = array<i32>} : memref<1x25x128xf32, #tpu.memory_space<vmem>>, vector<1x1x128xf32>,
    %cst_262 = arith.constant 0.000000e+00 : f32
    %679 = arith.cmpf one, %28, %28 : vector<1x128xf32>
    %680 = vector.broadcast %cst_262 : f32 to vector<1x128xf32>
    %681 = arith.select %679, %680, %28 : vector<1x128xi1>, vector<1x128xf32>
    %cst_263 = arith.constant 0x7F800000 : f32
    %682 = vector.broadcast %cst_263 : f32 to vector<1x128xf32>
    %683 = arith.cmpf oeq, %681, %682 : vector<1x128xf32>
    %cst_264 = arith.constant 3.40282347E+38 : f32
    %684 = vector.broadcast %cst_264 : f32 to vector<1x128xf32>
    %685 = arith.select %683, %684, %681 : vector<1x128xi1>, vector<1x128xf32>
    %cst_265 = arith.constant 0xFF800000 : f32
    %686 = vector.broadcast %cst_265 : f32 to vector<1x128xf32>
    %687 = arith.cmpf oeq, %685, %686 : vector<1x128xf32>
    %cst_266 = arith.constant -3.40282347E+38 : f32
    %688 = vector.broadcast %cst_266 : f32 to vector<1x128xf32>
    %689 = arith.select %687, %688, %685 : vector<1x128xi1>, vector<1x128xf32>
    %cst_267 = arith.constant 0.000000e+00 : f32
    %690 = vector.broadcast %cst_267 : f32 to vector<1x128xf32>
    %691 = arith.select %13, %689, %690 : vector<1x128xi1>, vector<1x128xf32>
    %cst_268 = arith.constant dense<0.000000e+00> : vector<1xf32>
    %692 = vector.multi_reduction <add>, %691, %cst_268 [1] : vector<1x128xf32> to vector<1xf32>
    %693 = vector.shape_cast %692 : vector<1xf32> to vector<1x1xf32>
    %cst_269 = arith.constant 0.0416666679 : f32
    %694 = vector.broadcast %cst_269 : f32 to vector<1x1xf32>
    %695 = arith.mulf %693, %694 : vector<1x1xf32>
    %696 = vector.broadcast %695 : vector<1x1xf32> to vector<1x128xf32>
    %697 = arith.subf %691, %696 : vector<1x128xf32>
    %cst_270 = arith.constant 0.000000e+00 : f32
    %698 = vector.broadcast %cst_270 : f32 to vector<1x128xf32>
    %699 = arith.select %13, %697, %698 : vector<1x128xi1>, vector<1x128xf32>
    %700 = arith.mulf %699, %699 : vector<1x128xf32>
    %cst_271 = arith.constant dense<0.000000e+00> : vector<1xf32>
    %701 = vector.multi_reduction <add>, %700, %cst_271 [1] : vector<1x128xf32> to vector<1xf32>
    %702 = vector.shape_cast %701 : vector<1xf32> to vector<1x1xf32>
    %cst_272 = arith.constant 0.0416666679 : f32
    %703 = vector.broadcast %cst_272 : f32 to vector<1x1xf32>
    %704 = arith.mulf %702, %703 : vector<1x1xf32>
    %cst_273 = arith.constant 9.99999974E-6 : f32
    %705 = vector.broadcast %cst_273 : f32 to vector<1x1xf32>
    %706 = arith.addf %704, %705 : vector<1x1xf32>
    %707 = math.rsqrt %706 : vector<1x1xf32>
    %708 = vector.broadcast %707 : vector<1x1xf32> to vector<1x128xf32>
    %709 = arith.mulf %699, %708 : vector<1x128xf32>
    %710 = vector.shape_cast %709 : vector<1x128xf32> to vector<1x1x128xf32>
    %c0_274 = arith.constant 0 : index
    %c18 = arith.constant 18 : index
    %c0_275 = arith.constant 0 : index
    %711 = vector.load %arg6[%c0_274, %c18, %c0_275] : memref<1x25x128xf32, #tpu.memory_space<vmem>>, vector<1x1x128xf32>
    tpu.vector_store %arg6[%c0_274, %c18, %c0_275], %710 {strides = array<i32>} : memref<1x25x128xf32, #tpu.memory_space<vmem>>, vector<1x1x128xf32>,
    %cst_276 = arith.constant 0.000000e+00 : f32
    %712 = arith.cmpf one, %34, %34 : vector<1x128xf32>
    %713 = vector.broadcast %cst_276 : f32 to vector<1x128xf32>
    %714 = arith.select %712, %713, %34 : vector<1x128xi1>, vector<1x128xf32>
    %cst_277 = arith.constant 0x7F800000 : f32
    %715 = vector.broadcast %cst_277 : f32 to vector<1x128xf32>
    %716 = arith.cmpf oeq, %714, %715 : vector<1x128xf32>
    %cst_278 = arith.constant 3.40282347E+38 : f32
    %717 = vector.broadcast %cst_278 : f32 to vector<1x128xf32>
    %718 = arith.select %716, %717, %714 : vector<1x128xi1>, vector<1x128xf32>
    %cst_279 = arith.constant 0xFF800000 : f32
    %719 = vector.broadcast %cst_279 : f32 to vector<1x128xf32>
    %720 = arith.cmpf oeq, %718, %719 : vector<1x128xf32>
    %cst_280 = arith.constant -3.40282347E+38 : f32
    %721 = vector.broadcast %cst_280 : f32 to vector<1x128xf32>
    %722 = arith.select %720, %721, %718 : vector<1x128xi1>, vector<1x128xf32>
    %cst_281 = arith.constant 0.000000e+00 : f32
    %723 = vector.broadcast %cst_281 : f32 to vector<1x128xf32>
    %724 = arith.select %13, %722, %723 : vector<1x128xi1>, vector<1x128xf32>
    %cst_282 = arith.constant dense<0.000000e+00> : vector<1xf32>
    %725 = vector.multi_reduction <add>, %724, %cst_282 [1] : vector<1x128xf32> to vector<1xf32>
    %726 = vector.shape_cast %725 : vector<1xf32> to vector<1x1xf32>
    %cst_283 = arith.constant 0.0416666679 : f32
    %727 = vector.broadcast %cst_283 : f32 to vector<1x1xf32>
    %728 = arith.mulf %726, %727 : vector<1x1xf32>
    %729 = vector.broadcast %728 : vector<1x1xf32> to vector<1x128xf32>
    %730 = arith.subf %724, %729 : vector<1x128xf32>
    %cst_284 = arith.constant 0.000000e+00 : f32
    %731 = vector.broadcast %cst_284 : f32 to vector<1x128xf32>
    %732 = arith.select %13, %730, %731 : vector<1x128xi1>, vector<1x128xf32>
    %733 = arith.mulf %732, %732 : vector<1x128xf32>
    %cst_285 = arith.constant dense<0.000000e+00> : vector<1xf32>
    %734 = vector.multi_reduction <add>, %733, %cst_285 [1] : vector<1x128xf32> to vector<1xf32>
    %735 = vector.shape_cast %734 : vector<1xf32> to vector<1x1xf32>
    %cst_286 = arith.constant 0.0416666679 : f32
    %736 = vector.broadcast %cst_286 : f32 to vector<1x1xf32>
    %737 = arith.mulf %735, %736 : vector<1x1xf32>
    %cst_287 = arith.constant 9.99999974E-6 : f32
    %738 = vector.broadcast %cst_287 : f32 to vector<1x1xf32>
    %739 = arith.addf %737, %738 : vector<1x1xf32>
    %740 = math.rsqrt %739 : vector<1x1xf32>
    %741 = vector.broadcast %740 : vector<1x1xf32> to vector<1x128xf32>
    %742 = arith.mulf %732, %741 : vector<1x128xf32>
    %743 = vector.shape_cast %742 : vector<1x128xf32> to vector<1x1x128xf32>
    %c0_288 = arith.constant 0 : index
    %c19 = arith.constant 19 : index
    %c0_289 = arith.constant 0 : index
    %744 = vector.load %arg6[%c0_288, %c19, %c0_289] : memref<1x25x128xf32, #tpu.memory_space<vmem>>, vector<1x1x128xf32>
    tpu.vector_store %arg6[%c0_288, %c19, %c0_289], %743 {strides = array<i32>} : memref<1x25x128xf32, #tpu.memory_space<vmem>>, vector<1x1x128xf32>,
    %745 = arith.subf %8, %82 : vector<1x128xf32>
    %746 = arith.mulf %745, %140 : vector<1x128xf32>
    %cst_290 = arith.constant 0.000000e+00 : f32
    %747 = arith.cmpf one, %746, %746 : vector<1x128xf32>
    %748 = vector.broadcast %cst_290 : f32 to vector<1x128xf32>
    %749 = arith.select %747, %748, %746 : vector<1x128xi1>, vector<1x128xf32>
    %cst_291 = arith.constant 0x7F800000 : f32
    %750 = vector.broadcast %cst_291 : f32 to vector<1x128xf32>
    %751 = arith.cmpf oeq, %749, %750 : vector<1x128xf32>
    %cst_292 = arith.constant 3.40282347E+38 : f32
    %752 = vector.broadcast %cst_292 : f32 to vector<1x128xf32>
    %753 = arith.select %751, %752, %749 : vector<1x128xi1>, vector<1x128xf32>
    %cst_293 = arith.constant 0xFF800000 : f32
    %754 = vector.broadcast %cst_293 : f32 to vector<1x128xf32>
    %755 = arith.cmpf oeq, %753, %754 : vector<1x128xf32>
    %cst_294 = arith.constant -3.40282347E+38 : f32
    %756 = vector.broadcast %cst_294 : f32 to vector<1x128xf32>
    %757 = arith.select %755, %756, %753 : vector<1x128xi1>, vector<1x128xf32>
    %cst_295 = arith.constant 0.000000e+00 : f32
    %758 = vector.broadcast %cst_295 : f32 to vector<1x128xf32>
    %759 = arith.select %13, %757, %758 : vector<1x128xi1>, vector<1x128xf32>
    %cst_296 = arith.constant dense<0.000000e+00> : vector<1xf32>
    %760 = vector.multi_reduction <add>, %759, %cst_296 [1] : vector<1x128xf32> to vector<1xf32>
    %761 = vector.shape_cast %760 : vector<1xf32> to vector<1x1xf32>
    %cst_297 = arith.constant 0.0416666679 : f32
    %762 = vector.broadcast %cst_297 : f32 to vector<1x1xf32>
    %763 = arith.mulf %761, %762 : vector<1x1xf32>
    %764 = vector.broadcast %763 : vector<1x1xf32> to vector<1x128xf32>
    %765 = arith.subf %759, %764 : vector<1x128xf32>
    %cst_298 = arith.constant 0.000000e+00 : f32
    %766 = vector.broadcast %cst_298 : f32 to vector<1x128xf32>
    %767 = arith.select %13, %765, %766 : vector<1x128xi1>, vector<1x128xf32>
    %768 = arith.mulf %767, %767 : vector<1x128xf32>
    %cst_299 = arith.constant dense<0.000000e+00> : vector<1xf32>
    %769 = vector.multi_reduction <add>, %768, %cst_299 [1] : vector<1x128xf32> to vector<1xf32>
    %770 = vector.shape_cast %769 : vector<1xf32> to vector<1x1xf32>
    %cst_300 = arith.constant 0.0416666679 : f32
    %771 = vector.broadcast %cst_300 : f32 to vector<1x1xf32>
    %772 = arith.mulf %770, %771 : vector<1x1xf32>
    %cst_301 = arith.constant 9.99999974E-6 : f32
    %773 = vector.broadcast %cst_301 : f32 to vector<1x1xf32>
    %774 = arith.addf %772, %773 : vector<1x1xf32>
    %775 = math.rsqrt %774 : vector<1x1xf32>
    %776 = vector.broadcast %775 : vector<1x1xf32> to vector<1x128xf32>
    %777 = arith.mulf %767, %776 : vector<1x128xf32>
    %778 = vector.shape_cast %777 : vector<1x128xf32> to vector<1x1x128xf32>
    %c0_302 = arith.constant 0 : index
    %c20 = arith.constant 20 : index
    %c0_303 = arith.constant 0 : index
    %779 = vector.load %arg6[%c0_302, %c20, %c0_303] : memref<1x25x128xf32, #tpu.memory_space<vmem>>, vector<1x1x128xf32>
    tpu.vector_store %arg6[%c0_302, %c20, %c0_303], %778 {strides = array<i32>} : memref<1x25x128xf32, #tpu.memory_space<vmem>>, vector<1x1x128xf32>,
    %cst_304 = arith.constant 0.000000e+00 : f32
    %780 = arith.cmpf one, %130, %130 : vector<1x128xf32>
    %781 = vector.broadcast %cst_304 : f32 to vector<1x128xf32>
    %782 = arith.select %780, %781, %130 : vector<1x128xi1>, vector<1x128xf32>
    %cst_305 = arith.constant 0x7F800000 : f32
    %783 = vector.broadcast %cst_305 : f32 to vector<1x128xf32>
    %784 = arith.cmpf oeq, %782, %783 : vector<1x128xf32>
    %cst_306 = arith.constant 3.40282347E+38 : f32
    %785 = vector.broadcast %cst_306 : f32 to vector<1x128xf32>
    %786 = arith.select %784, %785, %782 : vector<1x128xi1>, vector<1x128xf32>
    %cst_307 = arith.constant 0xFF800000 : f32
    %787 = vector.broadcast %cst_307 : f32 to vector<1x128xf32>
    %788 = arith.cmpf oeq, %786, %787 : vector<1x128xf32>
    %cst_308 = arith.constant -3.40282347E+38 : f32
    %789 = vector.broadcast %cst_308 : f32 to vector<1x128xf32>
    %790 = arith.select %788, %789, %786 : vector<1x128xi1>, vector<1x128xf32>
    %cst_309 = arith.constant 0.000000e+00 : f32
    %791 = vector.broadcast %cst_309 : f32 to vector<1x128xf32>
    %792 = arith.select %13, %790, %791 : vector<1x128xi1>, vector<1x128xf32>
    %cst_310 = arith.constant dense<0.000000e+00> : vector<1xf32>
    %793 = vector.multi_reduction <add>, %792, %cst_310 [1] : vector<1x128xf32> to vector<1xf32>
    %794 = vector.shape_cast %793 : vector<1xf32> to vector<1x1xf32>
    %cst_311 = arith.constant 0.0416666679 : f32
    %795 = vector.broadcast %cst_311 : f32 to vector<1x1xf32>
    %796 = arith.mulf %794, %795 : vector<1x1xf32>
    %797 = vector.broadcast %796 : vector<1x1xf32> to vector<1x128xf32>
    %798 = arith.subf %792, %797 : vector<1x128xf32>
    %cst_312 = arith.constant 0.000000e+00 : f32
    %799 = vector.broadcast %cst_312 : f32 to vector<1x128xf32>
    %800 = arith.select %13, %798, %799 : vector<1x128xi1>, vector<1x128xf32>
    %801 = arith.mulf %800, %800 : vector<1x128xf32>
    %cst_313 = arith.constant dense<0.000000e+00> : vector<1xf32>
    %802 = vector.multi_reduction <add>, %801, %cst_313 [1] : vector<1x128xf32> to vector<1xf32>
    %803 = vector.shape_cast %802 : vector<1xf32> to vector<1x1xf32>
    %cst_314 = arith.constant 0.0416666679 : f32
    %804 = vector.broadcast %cst_314 : f32 to vector<1x1xf32>
    %805 = arith.mulf %803, %804 : vector<1x1xf32>
    %cst_315 = arith.constant 9.99999974E-6 : f32
    %806 = vector.broadcast %cst_315 : f32 to vector<1x1xf32>
    %807 = arith.addf %805, %806 : vector<1x1xf32>
    %808 = math.rsqrt %807 : vector<1x1xf32>
    %809 = vector.broadcast %808 : vector<1x1xf32> to vector<1x128xf32>
    %810 = arith.mulf %800, %809 : vector<1x128xf32>
    %811 = vector.shape_cast %810 : vector<1x128xf32> to vector<1x1x128xf32>
    %c0_316 = arith.constant 0 : index
    %c21 = arith.constant 21 : index
    %c0_317 = arith.constant 0 : index
    %812 = vector.load %arg6[%c0_316, %c21, %c0_317] : memref<1x25x128xf32, #tpu.memory_space<vmem>>, vector<1x1x128xf32>
    tpu.vector_store %arg6[%c0_316, %c21, %c0_317], %811 {strides = array<i32>} : memref<1x25x128xf32, #tpu.memory_space<vmem>>, vector<1x1x128xf32>,
    %cst_318 = arith.constant 0.000000e+00 : f32
    %813 = vector.broadcast %cst_318 : f32 to vector<1x128xf32>
    %814 = arith.select %13, %92, %813 : vector<1x128xi1>, vector<1x128xf32>
    %cst_319 = arith.constant dense<0.000000e+00> : vector<1xf32>
    %815 = vector.multi_reduction <add>, %814, %cst_319 [1] : vector<1x128xf32> to vector<1xf32>
    %816 = vector.shape_cast %815 : vector<1xf32> to vector<1x1xf32>
    %cst_320 = arith.constant 0.0416666679 : f32
    %817 = vector.broadcast %cst_320 : f32 to vector<1x1xf32>
    %818 = arith.mulf %816, %817 : vector<1x1xf32>
    %819 = vector.broadcast %818 : vector<1x1xf32> to vector<1x128xf32>
    %820 = arith.subf %814, %819 : vector<1x128xf32>
    %cst_321 = arith.constant 0.000000e+00 : f32
    %821 = vector.broadcast %cst_321 : f32 to vector<1x128xf32>
    %822 = arith.select %13, %820, %821 : vector<1x128xi1>, vector<1x128xf32>
    %823 = arith.mulf %822, %822 : vector<1x128xf32>
    %cst_322 = arith.constant dense<0.000000e+00> : vector<1xf32>
    %824 = vector.multi_reduction <add>, %823, %cst_322 [1] : vector<1x128xf32> to vector<1xf32>
    %825 = vector.shape_cast %824 : vector<1xf32> to vector<1x1xf32>
    %cst_323 = arith.constant 0.0416666679 : f32
    %826 = vector.broadcast %cst_323 : f32 to vector<1x1xf32>
    %827 = arith.mulf %825, %826 : vector<1x1xf32>
    %cst_324 = arith.constant 9.99999974E-6 : f32
    %828 = vector.broadcast %cst_324 : f32 to vector<1x1xf32>
    %829 = arith.addf %827, %828 : vector<1x1xf32>
    %830 = math.rsqrt %829 : vector<1x1xf32>
    %831 = vector.broadcast %830 : vector<1x1xf32> to vector<1x128xf32>
    %832 = arith.mulf %822, %831 : vector<1x128xf32>
    %833 = vector.shape_cast %832 : vector<1x128xf32> to vector<1x1x128xf32>
    %c0_325 = arith.constant 0 : index
    %c22 = arith.constant 22 : index
    %c0_326 = arith.constant 0 : index
    %834 = vector.load %arg6[%c0_325, %c22, %c0_326] : memref<1x25x128xf32, #tpu.memory_space<vmem>>, vector<1x1x128xf32>
    tpu.vector_store %arg6[%c0_325, %c22, %c0_326], %833 {strides = array<i32>} : memref<1x25x128xf32, #tpu.memory_space<vmem>>, vector<1x1x128xf32>,
    %cst_327 = arith.constant 0.000000e+00 : f32
    %835 = arith.cmpf one, %150, %150 : vector<1x128xf32>
    %836 = vector.broadcast %cst_327 : f32 to vector<1x128xf32>
    %837 = arith.select %835, %836, %150 : vector<1x128xi1>, vector<1x128xf32>
    %cst_328 = arith.constant 0x7F800000 : f32
    %838 = vector.broadcast %cst_328 : f32 to vector<1x128xf32>
    %839 = arith.cmpf oeq, %837, %838 : vector<1x128xf32>
    %cst_329 = arith.constant 3.40282347E+38 : f32
    %840 = vector.broadcast %cst_329 : f32 to vector<1x128xf32>
    %841 = arith.select %839, %840, %837 : vector<1x128xi1>, vector<1x128xf32>
    %cst_330 = arith.constant 0xFF800000 : f32
    %842 = vector.broadcast %cst_330 : f32 to vector<1x128xf32>
    %843 = arith.cmpf oeq, %841, %842 : vector<1x128xf32>
    %cst_331 = arith.constant -3.40282347E+38 : f32
    %844 = vector.broadcast %cst_331 : f32 to vector<1x128xf32>
    %845 = arith.select %843, %844, %841 : vector<1x128xi1>, vector<1x128xf32>
    %cst_332 = arith.constant 0.000000e+00 : f32
    %846 = vector.broadcast %cst_332 : f32 to vector<1x128xf32>
    %847 = arith.select %13, %845, %846 : vector<1x128xi1>, vector<1x128xf32>
    %cst_333 = arith.constant dense<0.000000e+00> : vector<1xf32>
    %848 = vector.multi_reduction <add>, %847, %cst_333 [1] : vector<1x128xf32> to vector<1xf32>
    %849 = vector.shape_cast %848 : vector<1xf32> to vector<1x1xf32>
    %cst_334 = arith.constant 0.0416666679 : f32
    %850 = vector.broadcast %cst_334 : f32 to vector<1x1xf32>
    %851 = arith.mulf %849, %850 : vector<1x1xf32>
    %852 = vector.broadcast %851 : vector<1x1xf32> to vector<1x128xf32>
    %853 = arith.subf %847, %852 : vector<1x128xf32>
    %cst_335 = arith.constant 0.000000e+00 : f32
    %854 = vector.broadcast %cst_335 : f32 to vector<1x128xf32>
    %855 = arith.select %13, %853, %854 : vector<1x128xi1>, vector<1x128xf32>
    %856 = arith.mulf %855, %855 : vector<1x128xf32>
    %cst_336 = arith.constant dense<0.000000e+00> : vector<1xf32>
    %857 = vector.multi_reduction <add>, %856, %cst_336 [1] : vector<1x128xf32> to vector<1xf32>
    %858 = vector.shape_cast %857 : vector<1xf32> to vector<1x1xf32>
    %cst_337 = arith.constant 0.0416666679 : f32
    %859 = vector.broadcast %cst_337 : f32 to vector<1x1xf32>
    %860 = arith.mulf %858, %859 : vector<1x1xf32>
    %cst_338 = arith.constant 9.99999974E-6 : f32
    %861 = vector.broadcast %cst_338 : f32 to vector<1x1xf32>
    %862 = arith.addf %860, %861 : vector<1x1xf32>
    %863 = math.rsqrt %862 : vector<1x1xf32>
    %864 = vector.broadcast %863 : vector<1x1xf32> to vector<1x128xf32>
    %865 = arith.mulf %855, %864 : vector<1x128xf32>
    %866 = vector.shape_cast %865 : vector<1x128xf32> to vector<1x1x128xf32>
    %c0_339 = arith.constant 0 : index
    %c23 = arith.constant 23 : index
    %c0_340 = arith.constant 0 : index
    %867 = vector.load %arg6[%c0_339, %c23, %c0_340] : memref<1x25x128xf32, #tpu.memory_space<vmem>>, vector<1x1x128xf32>
    tpu.vector_store %arg6[%c0_339, %c23, %c0_340], %866 {strides = array<i32>} : memref<1x25x128xf32, #tpu.memory_space<vmem>>, vector<1x1x128xf32>,
    %cst_341 = arith.constant 0.000000e+00 : f32
    %868 = arith.cmpf one, %153, %153 : vector<1x128xf32>
    %869 = vector.broadcast %cst_341 : f32 to vector<1x128xf32>
    %870 = arith.select %868, %869, %153 : vector<1x128xi1>, vector<1x128xf32>
    %cst_342 = arith.constant 0x7F800000 : f32
    %871 = vector.broadcast %cst_342 : f32 to vector<1x128xf32>
    %872 = arith.cmpf oeq, %870, %871 : vector<1x128xf32>
    %cst_343 = arith.constant 3.40282347E+38 : f32
    %873 = vector.broadcast %cst_343 : f32 to vector<1x128xf32>
    %874 = arith.select %872, %873, %870 : vector<1x128xi1>, vector<1x128xf32>
    %cst_344 = arith.constant 0xFF800000 : f32
    %875 = vector.broadcast %cst_344 : f32 to vector<1x128xf32>
    %876 = arith.cmpf oeq, %874, %875 : vector<1x128xf32>
    %cst_345 = arith.constant -3.40282347E+38 : f32
    %877 = vector.broadcast %cst_345 : f32 to vector<1x128xf32>
    %878 = arith.select %876, %877, %874 : vector<1x128xi1>, vector<1x128xf32>
    %cst_346 = arith.constant 0.000000e+00 : f32
    %879 = vector.broadcast %cst_346 : f32 to vector<1x128xf32>
    %880 = arith.select %13, %878, %879 : vector<1x128xi1>, vector<1x128xf32>
    %cst_347 = arith.constant dense<0.000000e+00> : vector<1xf32>
    %881 = vector.multi_reduction <add>, %880, %cst_347 [1] : vector<1x128xf32> to vector<1xf32>
    %882 = vector.shape_cast %881 : vector<1xf32> to vector<1x1xf32>
    %cst_348 = arith.constant 0.0416666679 : f32
    %883 = vector.broadcast %cst_348 : f32 to vector<1x1xf32>
    %884 = arith.mulf %882, %883 : vector<1x1xf32>
    %885 = vector.broadcast %884 : vector<1x1xf32> to vector<1x128xf32>
    %886 = arith.subf %880, %885 : vector<1x128xf32>
    %cst_349 = arith.constant 0.000000e+00 : f32
    %887 = vector.broadcast %cst_349 : f32 to vector<1x128xf32>
    %888 = arith.select %13, %886, %887 : vector<1x128xi1>, vector<1x128xf32>
    %889 = arith.mulf %888, %888 : vector<1x128xf32>
    %cst_350 = arith.constant dense<0.000000e+00> : vector<1xf32>
    %890 = vector.multi_reduction <add>, %889, %cst_350 [1] : vector<1x128xf32> to vector<1xf32>
    %891 = vector.shape_cast %890 : vector<1xf32> to vector<1x1xf32>
    %cst_351 = arith.constant 0.0416666679 : f32
    %892 = vector.broadcast %cst_351 : f32 to vector<1x1xf32>
    %893 = arith.mulf %891, %892 : vector<1x1xf32>
    %cst_352 = arith.constant 9.99999974E-6 : f32
    %894 = vector.broadcast %cst_352 : f32 to vector<1x1xf32>
    %895 = arith.addf %893, %894 : vector<1x1xf32>
    %896 = math.rsqrt %895 : vector<1x1xf32>
    %897 = vector.broadcast %896 : vector<1x1xf32> to vector<1x128xf32>
    %898 = arith.mulf %888, %897 : vector<1x128xf32>
    %899 = vector.shape_cast %898 : vector<1x128xf32> to vector<1x1x128xf32>
    %c0_353 = arith.constant 0 : index
    %c24 = arith.constant 24 : index
    %c0_354 = arith.constant 0 : index
    %900 = vector.load %arg6[%c0_353, %c24, %c0_354] : memref<1x25x128xf32, #tpu.memory_space<vmem>>, vector<1x1x128xf32>
    tpu.vector_store %arg6[%c0_353, %c24, %c0_354], %899 {strides = array<i32>} : memref<1x25x128xf32, #tpu.memory_space<vmem>>, vector<1x1x128xf32>,
    return
  }
  func.func @transform_0(%arg0: i32) -> (i32, i32, i32) {
    %c0_i32 = arith.constant 0 : i32
    %c0_i32_0 = arith.constant 0 : i32
    %c0_i32_1 = arith.constant 0 : i32
    return %arg0, %c0_i32, %c0_i32_0 : i32, i32, i32
  }
  func.func @transform_1(%arg0: i32) -> (i32, i32) {
    %c0_i32 = arith.constant 0 : i32
    %c0_i32_0 = arith.constant 0 : i32
    %c0_i32_1 = arith.constant 0 : i32
    return %c0_i32, %c0_i32_0 : i32, i32
  }
  func.func @transform_2(%arg0: i32) -> (i32, i32) {
    %c0_i32 = arith.constant 0 : i32
    %c0_i32_0 = arith.constant 0 : i32
    %c0_i32_1 = arith.constant 0 : i32
    return %c0_i32, %c0_i32_0 : i32, i32
  }
  func.func @transform_3(%arg0: i32) -> (i32, i32) {
    %c0_i32 = arith.constant 0 : i32
    %c0_i32_0 = arith.constant 0 : i32
    %c0_i32_1 = arith.constant 0 : i32
    return %c0_i32, %c0_i32_0 : i32, i32
  }
  func.func @transform_4(%arg0: i32) -> (i32, i32) {
    %c0_i32 = arith.constant 0 : i32
    %c0_i32_0 = arith.constant 0 : i32
    %c0_i32_1 = arith.constant 0 : i32
    return %c0_i32, %c0_i32_0 : i32, i32
  }
  func.func @transform_5(%arg0: i32) -> (i32, i32, i32) {
    %c0_i32 = arith.constant 0 : i32
    %c0_i32_0 = arith.constant 0 : i32
    %c0_i32_1 = arith.constant 0 : i32
    return %arg0, %c0_i32, %c0_i32_0 : i32, i32, i32
  }
}

</mosaic_0001>

<llo_original>
// kernel: enhanced_feature_layer.1
$region0: #{enhanced_feature_layer.1}
  #allocation0 [shape = 'u32[]', space=smem, size = 0x4, offset = 0x4, fixed_abs, tag = 'smem constant byte address 0x4 - core index']
  #allocation1 [shape = 'u32[144,128]{1,0:T(1,128)}', space=vmem, size = 0x12000, scoped, tag = 'internal scratch']
  %s0 = inlined_call_operand.vmem [shape: f32[2,5,128], index: 0, kind: input, shape index: {}]
  %s1 = inlined_call_operand.hbm [shape: f32[128,128], index: 1, kind: input, shape index: {}]
  %s2 = inlined_call_operand.vmem [shape: f32[4,128], index: 2, kind: input, shape index: {}]
  %s3 = inlined_call_operand.vmem [shape: f32[4,128], index: 3, kind: input, shape index: {}]
  %s4 = inlined_call_operand.vmem [shape: f32[2,128], index: 4, kind: input, shape index: {}]
  %s5 = inlined_call_operand.vmem [shape: f32[2,25,128], index: 5, kind: output, shape index: {}]
  %s6 = sld [smem:[#allocation0]]
  $region57: #{enhanced_feature_layer.1} parent=0
    _
  %s8 = ssub.s32 1, %s6
  %s9 = scalar_select 0, %s8, %s6
  $region1: #{enhanced_feature_layer.1} parent=0
    #allocation2 [shape = 'u8[65536]{0}', space=vmem, size = 0x10000, scoped, tag = 'input window, operand 1, single buffered']
    #allocation3 [shape = 's32[2]{0}', space=sflag, size = 0x8, scoped, tag = 'scoped memory for enhanced_feature_layer.1']
    %10 = vsyncpa [#allocation3], 0
    loop: start=0, step=1, limit=4
    $region2: #{enhanced_feature_layer.1} parent=1 // loop_pre_header
      _
    $region3: #{enhanced_feature_layer.1} parent=1 // loop_header
      %s12 = sphi 0, %s16
      %p13 = scmp.ge.s32.totalorder %s12, 4
      %s22 = sphi 0, %s24
      %s25 = sphi 0, %s22
      %s26 = sphi 0, %s25
      %s42 = sphi 0, %s26
      %s46 = sphi 0, %s46
      %s48 = sphi 0, %s46
      %s49 = sphi 0, %s48
      %s63 = sphi 0, %s49
      %s67 = sphi 0, %s67
      %s69 = sphi 0, %s67
      %s70 = sphi 0, %s69
      %s84 = sphi 0, %s70
      %s88 = sphi 0, %s88
      %s90 = sphi 0, %s88
      %s91 = sphi 0, %s90
      %s105 = sphi 0, %s91
      %s109 = sphi 0, %s109
      %s111 = sphi 0, %s109
      %s112 = sphi 0, %s111
      %s126 = sphi 0, %s112
      %s132 = sphi 0, %s134
      %s135 = sphi 0, %s132
      %s136 = sphi 0, %s135
      %s152 = sphi 0, %s136
    $region4: #{enhanced_feature_layer.1} parent=1 // loop_header_branch
      %15 = sbr.rel (%p13) target = $region8
    $region5: #{enhanced_feature_layer.1} parent=1 // loop_body
      %s17 = ssub.s32 %s12, 1
      %s18 = ssub.s32 %s12, 2
      %s19 = sadd.s32 %s12, 1
      %s20 = ssub.s32 %s12, %s19
      %p21 = scmp.eq.s32.totalorder %s20, 0
      %s23 = sadd.s32 %s22, 1
      %s24 = scalar_select %p21, %s22, %s23
      %p27 = pneg %p21
      %p28 = scmp.eq.s32.totalorder %s12, 1
      %p29 = por %p27, %p28
      %p30 = scmp.ne.s32.totalorder %s22, %s25
      %p31 = scmp.eq.s32.totalorder %s12, 0
      %p32 = por %p30, %p31
      %p33 = scmp.ne.s32.totalorder %s22, %s25
      %p34 = scmp.eq.s32.totalorder %s17, 1
      %p35 = por %p33, %p34
      %p36 = scmp.ne.s32.totalorder %s25, %s26
      %p37 = scmp.eq.s32.totalorder %s17, 0
      %p38 = por %p36, %p37
      %p39 = scmp.ne.s32.totalorder %s25, %s26
      %p40 = scmp.eq.s32.totalorder %s18, 1
      %p41 = por %p39, %p40
      %p43 = scmp.ne.s32.totalorder %s26, %s42
      %p44 = scmp.eq.s32.totalorder %s18, 0
      %p45 = por %p43, %p44
      %s47 = sadd.s32 %s46, 1
      %p50 = scmp.eq.s32.totalorder %s12, 1
      %p51 = scmp.ne.s32.totalorder %s46, %s48
      %p52 = scmp.eq.s32.totalorder %s12, 0
      %p53 = por %p51, %p52
      %p54 = scmp.ne.s32.totalorder %s46, %s48
      %p55 = scmp.eq.s32.totalorder %s17, 1
      %p56 = por %p54, %p55
      %p57 = scmp.ne.s32.totalorder %s48, %s49
      %p58 = scmp.eq.s32.totalorder %s17, 0
      %p59 = por %p57, %p58
      %p60 = scmp.ne.s32.totalorder %s48, %s49
      %p61 = scmp.eq.s32.totalorder %s18, 1
      %p62 = por %p60, %p61
      %p64 = scmp.ne.s32.totalorder %s49, %s63
      %p65 = scmp.eq.s32.totalorder %s18, 0
      %p66 = por %p64, %p65
      %s68 = sadd.s32 %s67, 1
      %p71 = scmp.eq.s32.totalorder %s12, 1
      %p72 = scmp.ne.s32.totalorder %s67, %s69
      %p73 = scmp.eq.s32.totalorder %s12, 0
      %p74 = por %p72, %p73
      %p75 = scmp.ne.s32.totalorder %s67, %s69
      %p76 = scmp.eq.s32.totalorder %s17, 1
      %p77 = por %p75, %p76
      %p78 = scmp.ne.s32.totalorder %s69, %s70
      %p79 = scmp.eq.s32.totalorder %s17, 0
      %p80 = por %p78, %p79
      %p81 = scmp.ne.s32.totalorder %s69, %s70
      %p82 = scmp.eq.s32.totalorder %s18, 1
      %p83 = por %p81, %p82
      %p85 = scmp.ne.s32.totalorder %s70, %s84
      %p86 = scmp.eq.s32.totalorder %s18, 0
      %p87 = por %p85, %p86
      %s89 = sadd.s32 %s88, 1
      %p92 = scmp.eq.s32.totalorder %s12, 1
      %p93 = scmp.ne.s32.totalorder %s88, %s90
      %p94 = scmp.eq.s32.totalorder %s12, 0
      %p95 = por %p93, %p94
      %p96 = scmp.ne.s32.totalorder %s88, %s90
      %p97 = scmp.eq.s32.totalorder %s17, 1
      %p98 = por %p96, %p97
      %p99 = scmp.ne.s32.totalorder %s90, %s91
      %p100 = scmp.eq.s32.totalorder %s17, 0
      %p101 = por %p99, %p100
      %p102 = scmp.ne.s32.totalorder %s90, %s91
      %p103 = scmp.eq.s32.totalorder %s18, 1
      %p104 = por %p102, %p103
      %p106 = scmp.ne.s32.totalorder %s91, %s105
      %p107 = scmp.eq.s32.totalorder %s18, 0
      %p108 = por %p106, %p107
      %s110 = sadd.s32 %s109, 1
      %p113 = scmp.eq.s32.totalorder %s12, 1
      %p114 = scmp.ne.s32.totalorder %s109, %s111
      %p115 = scmp.eq.s32.totalorder %s12, 0
      %p116 = por %p114, %p115
      %p117 = scmp.ne.s32.totalorder %s109, %s111
      %p118 = scmp.eq.s32.totalorder %s17, 1
      %p119 = por %p117, %p118
      %p120 = scmp.ne.s32.totalorder %s111, %s112
      %p121 = scmp.eq.s32.totalorder %s17, 0
      %p122 = por %p120, %p121
      %p123 = scmp.ne.s32.totalorder %s111, %s112
      %p124 = scmp.eq.s32.totalorder %s18, 1
      %p125 = por %p123, %p124
      %p127 = scmp.ne.s32.totalorder %s112, %s126
      %p128 = scmp.eq.s32.totalorder %s18, 0
      %p129 = por %p127, %p128
      %s130 = ssub.s32 %s12, %s19
      %p131 = scmp.eq.s32.totalorder %s130, 0
      %s133 = sadd.s32 %s132, 1
      %s134 = scalar_select %p131, %s132, %s133
      %p137 = pneg %p131
      %p138 = scmp.eq.s32.totalorder %s12, 1
      %p139 = por %p137, %p138
      %p140 = scmp.ne.s32.totalorder %s132, %s135
      %p141 = scmp.eq.s32.totalorder %s12, 0
      %p142 = por %p140, %p141
      %p143 = scmp.ne.s32.totalorder %s132, %s135
      %p144 = scmp.eq.s32.totalorder %s17, 1
      %p145 = por %p143, %p144
      %p146 = scmp.ne.s32.totalorder %s135, %s136
      %p147 = scmp.eq.s32.totalorder %s17, 0
      %p148 = por %p146, %p147
      %p149 = scmp.ne.s32.totalorder %s135, %s136
      %p150 = scmp.eq.s32.totalorder %s18, 1
      %p151 = por %p149, %p150
      %p153 = scmp.ne.s32.totalorder %s136, %s152
      %p154 = scmp.eq.s32.totalorder %s18, 0
      %p155 = por %p153, %p154
      %p156 = scmp.le.s32.totalorder 1, %s12
      %p157 = scmp.lt.s32.totalorder %s12, 3
      %p158 = pnand %p156, %p157
      %p159 = pneg %p158
      // Predicated region
      $region9: #{enhanced_feature_layer.1} parent=5 // pred_check
        _
      $region10: #{enhanced_feature_layer.1} parent=5 // pred_check_branch
        %161 = sbr.rel (%p158) target = $region12
      $region11: #{enhanced_feature_layer.1} parent=5 // pred_region
        %s162 = ssub.s32 %s12, 1
        // Predicated region
        $region13: #{enhanced_feature_layer.1} parent=11 // pred_check
          %p163 = pneg %p59
        $region14: #{enhanced_feature_layer.1} parent=11 // pred_check_branch
          %165 = sbr.rel (%p163) target = $region16
        $region15: #{enhanced_feature_layer.1} parent=11 // pred_region
          %s167 = ssub.s32 2048, 2048
          %168 = vsyncadd [#allocation3], %s167
          %s169 = sshll.u32 [#allocation2], 4
          %s170 = int_to_ptr.vmem [resolvable:$true] %s169
          %175 = dma.hbm_to_vmem [thread:$0]  %s1, 2048, %s170, [#allocation3], 128, 128, 8
        $region16: #{enhanced_feature_layer.1} parent=11 // pred_fallthru
          _
        // Predicated region
        $region17: #{enhanced_feature_layer.1} parent=11 // pred_check
          %p176 = pneg %p80
        $region18: #{enhanced_feature_layer.1} parent=11 // pred_check_branch
          %178 = sbr.rel (%p176) target = $region20
        $region19: #{enhanced_feature_layer.1} parent=11 // pred_region
          _
        $region20: #{enhanced_feature_layer.1} parent=11 // pred_fallthru
          _
        // Predicated region
        $region21: #{enhanced_feature_layer.1} parent=11 // pred_check
          %p179 = pneg %p101
        $region22: #{enhanced_feature_layer.1} parent=11 // pred_check_branch
          %181 = sbr.rel (%p179) target = $region24
        $region23: #{enhanced_feature_layer.1} parent=11 // pred_region
          _
        $region24: #{enhanced_feature_layer.1} parent=11 // pred_fallthru
          _
        // Predicated region
        $region25: #{enhanced_feature_layer.1} parent=11 // pred_check
          %p182 = pneg %p122
        $region26: #{enhanced_feature_layer.1} parent=11 // pred_check_branch
          %184 = sbr.rel (%p182) target = $region28
        $region27: #{enhanced_feature_layer.1} parent=11 // pred_region
          _
        $region28: #{enhanced_feature_layer.1} parent=11 // pred_fallthru
          _
      $region12: #{enhanced_feature_layer.1} parent=5 // pred_fallthru
        _
      %p185 = scmp.lt.s32.totalorder %s12, 2
      // Predicated region
      $region29: #{enhanced_feature_layer.1} parent=5 // pred_check
        %p186 = pneg %p185
      $region30: #{enhanced_feature_layer.1} parent=5 // pred_check_branch
        %188 = sbr.rel (%p186) target = $region32
      $region31: #{enhanced_feature_layer.1} parent=5 // pred_region
        // Predicated region
        $region33: #{enhanced_feature_layer.1} parent=31 // pred_check
          %p189 = pneg %p32
        $region34: #{enhanced_feature_layer.1} parent=31 // pred_check_branch
          %191 = sbr.rel (%p189) target = $region36
        $region35: #{enhanced_feature_layer.1} parent=31 // pred_region
          %p192 = scmp.lt.s32.totalorder %s12, 1
          %s193 = scalar_select %p192, %s12, 1
          %s194 = smul.addr %s193, 8
          %s195 = scalar_lea.vmem %s0, %s194
        $region36: #{enhanced_feature_layer.1} parent=31 // pred_fallthru
          _
      $region32: #{enhanced_feature_layer.1} parent=5 // pred_fallthru
        _
      %p196 = scmp.le.s32.totalorder 1, %s12
      %p197 = scmp.lt.s32.totalorder %s12, 3
      %p198 = pnand %p196, %p197
      %p199 = pneg %p198
      // Predicated region
      $region37: #{enhanced_feature_layer.1} parent=5 // pred_check
        _
      $region38: #{enhanced_feature_layer.1} parent=5 // pred_check_branch
        %201 = sbr.rel (%p198) target = $region40
      $region39: #{enhanced_feature_layer.1} parent=5 // pred_region
        %s202 = ssub.s32 %s12, 1
        // Predicated region
        $region41: #{enhanced_feature_layer.1} parent=39 // pred_check
          %p203 = pneg %p59
        $region42: #{enhanced_feature_layer.1} parent=39 // pred_check_branch
          %205 = sbr.rel (%p203) target = $region44
        $region43: #{enhanced_feature_layer.1} parent=39 // pred_region
          %206 = dma.done [#allocation3], 2048
        $region44: #{enhanced_feature_layer.1} parent=39 // pred_fallthru
          _
        %p207 = scmp.lt.s32.totalorder %s17, 1
        %s208 = scalar_select %p207, %s17, 1
        %s209 = smul.addr %s208, 8
        %s210 = scalar_lea.vmem %s0, %s209
        %p211 = pneg %p38
        %p212 = pneg %p35
        %p213 = pneg %p59
        %p214 = pneg %p56
        %p215 = pneg %p80
        %p216 = pneg %p77
        %p217 = pneg %p101
        %p218 = pneg %p98
        %p219 = pneg %p122
        %p220 = pneg %p119
        %p221 = pneg %p148
        %p222 = pneg %p145
        %p223 = scmp.lt.s32.totalorder %s17, 1
        %s224 = scalar_select %p223, %s17, 1
        %s225 = smul.addr %s224, 4
        %s226 = smul.addr %s225, 8
        %s227 = scalar_lea.vmem %s5, %s226
        %p228 = scmp.lt.s32.totalorder %s17, 1
        %s229 = scalar_select %p228, %s17, 1
        %s230 = smul.addr %s229, 8
        %s231 = scalar_lea.vmem %s0, %s230
        %p232 = scmp.lt.s32.totalorder %s17, 1
        %s233 = scalar_select %p232, %s17, 1
        %s234 = smul.addr %s233, 4
        %s235 = smul.addr %s234, 8
        %s236 = scalar_lea.vmem %s5, %s235
        %v237 = vld [vmem:[%s231] sm:$0x1f]
        %v238 = vlaneseq
        %v239 = vand.u32 %v238, 127
        %vm240 = vcmp.lt.s32.totalorder %v239, 24
        %v241 = vadd.f32 %v237, 1e-08
        %v242 = vlog2.pop %v241
        %v243 = vmul.f32 %v242, 0.6931472
        %vm244 = vcmp.ge.s32.totalorder %v239, 1
        %v246 = vrot.slane %v243, 3
        %248 = vrot.lane.b32.xlu0 %v246, 1
        %v249 = vpop.permute.xlu0 %248
        %v251 = vrot.slane %v249, 5
        %v253 = vsub.f32 %v243, %v251
        %v254 = vsel %vm244, %v253, 0.0
        %vm255 = vcmp.ge.s32.totalorder %v239, 3
        %256 = vrot.lane.b32.xlu0 %v246, 3
        %v257 = vpop.permute.xlu0 %256
        %v259 = vrot.slane %v257, 5
        %v261 = vsub.f32 %v243, %v259
        %v262 = vsel %vm255, %v261, 0.0
        %vm263 = vcmp.ge.s32.totalorder %v239, 6
        %264 = vrot.lane.b32.xlu0 %v246, 6
        %v265 = vpop.permute.xlu0 %264
        %v267 = vrot.slane %v265, 5
        %v269 = vsub.f32 %v243, %v267
        %v270 = vsel %vm263, %v269, 0.0
        %v272 = vrot.slane %v237, 3
        %274 = vrot.lane.b32.xlu0 %v272, 1
        %v275 = vpop.permute.xlu0 %274
        %v277 = vrot.slane %v275, 5
        %v279 = vsub.f32 %v237, %v277
        %v280 = vsel %vm244, %v279, 0.0
        %v281 = vmax.f32 %v280, 0.0
        %v282 = vsub.f32 0.0, %v280
        %v283 = vmax.f32 %v282, 0.0
        %vm284 = vcmp.gt.f32.partialorder %v280, 0.0
        %vm285 = vcmp.lt.f32.partialorder %v280, 0.0
        %v286 = vsel %vm285, -1.0, 0.0
        %v287 = vsel %vm284, 1.0, %v286
        %v288 = vld [vmem:[%s2] sm:$0xf]
        %v289 = vld [vmem:[%s3] sm:$0xf]
        %v291 = vrot.slane %v288, 5
        %v293 = vmul.f32 %v237, %v291
        %v294 = vrot.slane %v288, 6
        %v296 = vmul.f32 %v237, %v294
        %v297 = vrot.slane %v288, 7
        %v299 = vmul.f32 %v237, %v297
        %v300 = vmul.f32 %v237, %v288
        %v302 = vrot.slane %v287, 7
        %v304 = vmul.f32 %v237, %v302
        %v306 = vrot.slane %v293, 3
        %v309 = vrot.slane %v296, 2
        %v312 = vrot.slane %v299, 1
        %v314 = vrot.slane %v296, 7
        %v317 = vrot.slane %v304, 6
        %v320 = vrot.slane %v281, 4
        %v323 = vrot.slane %v283, 3
        %vm325 = vcmask 1040384
        %v326 = vsel %vm325, %v306, %v309
        %vm327 = vcmask 1041408
        %v328 = vsel %vm327, %v326, %v312
        %vm329 = vcmask 1042432
        %v330 = vsel %vm329, %v328, %v300
        %vm331 = vcmask 1043456
        %v332 = vsel %vm331, %v330, %v293
        %vm333 = vcmask 1044480
        %v334 = vsel %vm333, %v332, %v314
        %vm335 = vcmask 1045504
        %v336 = vsel %vm335, %v334, %v317
        %vm337 = vcmask 1046528
        %v338 = vsel %vm337, %v336, %v320
        %v339 = vld [vmem:[#allocation2] sm:$0xff]
        %v340 = vld [vmem:[#allocation2 + $0x8] sm:$0xff]
        %v341 = vld [vmem:[#allocation2 + $0x10] sm:$0xff]
        %v342 = vld [vmem:[#allocation2 + $0x18] sm:$0xff]
        %v343 = vld [vmem:[#allocation2 + $0x20] sm:$0xff]
        %v344 = vld [vmem:[#allocation2 + $0x28] sm:$0xff]
        %v345 = vld [vmem:[#allocation2 + $0x30] sm:$0xff]
        %v346 = vld [vmem:[#allocation2 + $0x38] sm:$0xff]
        %v347 = vld [vmem:[#allocation2 + $0x40] sm:$0xff]
        %v348 = vld [vmem:[#allocation2 + $0x48] sm:$0xff]
        %v349 = vld [vmem:[#allocation2 + $0x50] sm:$0xff]
        %v350 = vld [vmem:[#allocation2 + $0x58] sm:$0xff]
        %v351 = vld [vmem:[#allocation2 + $0x60] sm:$0xff]
        %v352 = vld [vmem:[#allocation2 + $0x68] sm:$0xff]
        %v353 = vld [vmem:[#allocation2 + $0x70] sm:$0xff]
        %v354 = vld [vmem:[#allocation2 + $0x78] sm:$0xff]
        %355 = vmatprep.subr.mxu0 0.0
        %356 = vmatpush1.msra.mxu0 %v354
        %357 = vmatprep.subr.mxu0 0.0
        %358 = vmatpush1.msra.mxu0 %v353
        %359 = vmatprep.subr.mxu0 0.0
        %360 = vmatpush1.msra.mxu0 %v352
        %361 = vmatprep.subr.mxu0 0.0
        %362 = vmatpush1.msra.mxu0 %v351
        %363 = vmatprep.subr.mxu0 0.0
        %364 = vmatpush1.msra.mxu0 %v350
        %365 = vmatprep.subr.mxu0 0.0
        %366 = vmatpush1.msra.mxu0 %v349
        %367 = vmatprep.subr.mxu0 0.0
        %368 = vmatpush1.msra.mxu0 %v348
        %369 = vmatprep.subr.mxu0 0.0
        %370 = vmatpush1.msra.mxu0 %v347
        %371 = vmatprep.subr.mxu0 0.0
        %372 = vmatpush1.msra.mxu0 %v346
        %373 = vmatprep.subr.mxu0 0.0
        %374 = vmatpush1.msra.mxu0 %v345
        %375 = vmatprep.subr.mxu0 0.0
        %376 = vmatpush1.msra.mxu0 %v344
        %377 = vmatprep.subr.mxu0 0.0
        %378 = vmatpush1.msra.mxu0 %v343
        %379 = vmatprep.subr.mxu0 0.0
        %380 = vmatpush1.msra.mxu0 %v342
        %381 = vmatprep.subr.mxu0 0.0
        %382 = vmatpush1.msra.mxu0 %v341
        %383 = vmatprep.subr.mxu0 0.0
        %384 = vmatpush1.msra.mxu0 %v340
        %385 = vmatprep.subr.mxu0 0.0
        %386 = vmatpush1.msra.mxu0 %v339
        %387 = vmatprep.subr.mxu0 0.0
        %388 = vmatpush2.msra.mxu0 0.0
        %389 = vmatprep.subr.mxu0 0.0
        %390 = vmatpush2.msra.mxu0 0.0
        %391 = vmatprep.subr.mxu0 0.0
        %392 = vmatpush2.msra.mxu0 0.0
        %393 = vmatprep.subr.mxu0 0.0
        %394 = vmatpush2.msra.mxu0 0.0
        %395 = vmatprep.subr.mxu0 0.0
        %396 = vmatpush2.msra.mxu0 0.0
        %397 = vmatprep.subr.mxu0 0.0
        %398 = vmatpush2.msra.mxu0 0.0
        %399 = vmatprep.subr.mxu0 0.0
        %400 = vmatpush2.msra.mxu0 0.0
        %401 = vmatprep.subr.mxu0 0.0
        %402 = vmatpush2.msra.mxu0 0.0
        %403 = vmatprep.subr.mxu0 0.0
        %404 = vmatpush2.msra.mxu0 0.0
        %405 = vmatprep.subr.mxu0 0.0
        %406 = vmatpush2.msra.mxu0 0.0
        %407 = vmatprep.subr.mxu0 0.0
        %408 = vmatpush2.msra.mxu0 0.0
        %409 = vmatprep.subr.mxu0 0.0
        %410 = vmatpush2.msra.mxu0 0.0
        %411 = vmatprep.subr.mxu0 0.0
        %412 = vmatpush2.msra.mxu0 0.0
        %413 = vmatprep.subr.mxu0 0.0
        %414 = vmatpush2.msra.mxu0 0.0
        %415 = vmatprep.subr.mxu0 0.0
        %416 = vmatpush2.msra.mxu0 0.0
        %417 = vmatprep.subr.mxu0 0.0
        %418 = vmatpush2.msra.mxu0 0.0
        %419 = vmatprep.mubr.f32.mxu0 0.0
        %420 = vmatmul.mubr.f32.gmra.mxu0 %v338
        %v421 = vpop.f32.mrf.mxu0
        %v422 = vadd.f32 0.0, %v421
        %v423 = vpop.f32.mrf.mxu0
        %424 = vmatprep.mubr.f32.mxu0 0.0
        %425 = vmatmul.mubr.f32.gmra.mxu0 %v323
        %v426 = vpop.f32.mrf.mxu0
        %v427 = vadd.f32 0.0, %v426
        %v428 = vpop.f32.mrf.mxu0
        %429 = vdwg.mxu0
        %v430 = vmul.f32 %v422, %v289
        %v432 = vrot.slane %v289, 5
        %v434 = vmul.f32 %v422, %v432
        %v435 = vcvt.s32.f32 %v239
        %v436 = vsub.f32 14.0, %v435
        %v437 = vmax.f32 %v436, 0.0
        %vm438 = vcmp.ge.s32.totalorder %v239, 14
        %v440 = vrot.slane %v422, 7
        %442 = vrot.lane.b32.xlu0 %v440, 14
        %v443 = vpop.permute.xlu0 %442
        %v444 = vsel %vm438, %v443, 0.0
        %v446 = vrot.slane %v444, 1
        %v448 = vsub.f32 %v422, %v446
        %449 = vset.pattern.permute.xlu0 1
        %450 = vperm.xlu0 %449, %v281
        %v451 = vpop.permute.xlu0 %450
        %v453 = vmul.f32 %v437, %v451
        %v455 = vrot.slane %v453, 4
        %v457 = vadd.f32 %v448, %v455
        %v458 = vmul.f32 %v457, 0.071428575
        %459 = vrot.lane.b32.xlu0 %v427, 14
        %v460 = vpop.permute.xlu0 %459
        %v461 = vsel %vm438, %v460, 0.0
        %v462 = vsub.f32 %v427, %v461
        %463 = vset.pattern.permute.xlu0 1
        %464 = vperm.xlu0 %463, %v283
        %v465 = vpop.permute.xlu0 %464
        %v467 = vmul.f32 %v437, %v465
        %v469 = vrot.slane %v467, 3
        %v471 = vadd.f32 %v462, %v469
        %v472 = vmul.f32 %v471, 0.071428575
        %v473 = vmul.f32 %v458, 100.0
        %v475 = vrot.slane %v472, 1
        %v477 = vadd.f32 %v458, %v475
        %v478 = vadd.f32 %v477, 1e-08
        %v479 = vrcp.pop %v478
        %v480 = vmul.f32 %v473, %v479
        %v481 = vrcp.pop %v241
        %v482 = vrcp.pop %v237
        %v483 = vadd.f32 %v430, 1e-08
        %v484 = vrcp.pop %v483
        %v485 = vrot.slane %v237, 1
        %v487 = vsub.f32 %v237, %v485
        %v489 = vrot.slane %v481, 2
        %v491 = vmul.f32 %v487, %v489
        %v492 = vsub.f32 %v237, %v272
        %v493 = vand.u32 2147483647, %v492
        %v494 = vrot.slane %v481, 3
        %v496 = vmul.f32 %v493, %v494
        %v497 = vld [vmem:[%s4] sm:$0x1]
        %v498 = vld [vmem:[%s4 + $0x1] sm:$0x1]
        %500 = vset.pattern.permute.xlu0 23
        %501 = vperm.xlu0 %500, %v254
        %v502 = vpop.permute.xlu0 %501
        %505 = vset.pattern.permute.xlu0 23
        %506 = vperm.xlu0 %505, %v491
        %v507 = vpop.permute.xlu0 %506
        %v509 = vsel %vm240, %v237, 0.0
        %v510 = vsel %vm325, %v509, 0.0
        %511 = vadd.xlane.f32.xlu0 %v510
        %v512 = vpop.xlane.xlu0 %511
        %v513 = vmul.f32 %v512, 0.041666668
        %v514 = vsub.f32 %v509, %v513
        %v515 = vsel %vm240, %v514, 0.0
        %v516 = vmul.f32 %v515, %v515
        %v517 = vsel %vm325, %v516, 0.0
        %518 = vadd.xlane.f32.xlu0 %v517
        %v519 = vpop.xlane.xlu0 %518
        %v520 = vmul.f32 %v519, 0.041666668
        %v521 = vadd.f32 %v520, 1e-05
        %v522 = vrsqrt.pop %v521
        %v523 = vmul.f32 %v515, %v522
        %524 = vst [vmem:[%s236] sm:$0x1] %v523
        %vm525 = vcmask 1041409
        %v526 = vsel %vm525, %v509, 0.0
        %527 = vadd.xlane.f32.xlu0 %v526
        %v528 = vpop.xlane.xlu0 %527
        %v529 = vmul.f32 %v528, 0.041666668
        %v530 = vsub.f32 %v509, %v529
        %v531 = vsel %vm240, %v530, 0.0
        %v532 = vmul.f32 %v531, %v531
        %v533 = vsel %vm525, %v532, 0.0
        %534 = vadd.xlane.f32.xlu0 %v533
        %v535 = vpop.xlane.xlu0 %534
        %v536 = vmul.f32 %v535, 0.041666668
        %v537 = vadd.f32 %v536, 1e-05
        %v538 = vrsqrt.pop %v537
        %v539 = vmul.f32 %v531, %v538
        %540 = vst [vmem:[%s236] sm:$0x2] %v539
        %vm541 = vcmask 1042434
        %v542 = vsel %vm541, %v509, 0.0
        %543 = vadd.xlane.f32.xlu0 %v542
        %v544 = vpop.xlane.xlu0 %543
        %v545 = vmul.f32 %v544, 0.041666668
        %v546 = vsub.f32 %v509, %v545
        %v547 = vsel %vm240, %v546, 0.0
        %v548 = vmul.f32 %v547, %v547
        %v549 = vsel %vm541, %v548, 0.0
        %550 = vadd.xlane.f32.xlu0 %v549
        %v551 = vpop.xlane.xlu0 %550
        %v552 = vmul.f32 %v551, 0.041666668
        %v553 = vadd.f32 %v552, 1e-05
        %v554 = vrsqrt.pop %v553
        %v555 = vmul.f32 %v547, %v554
        %556 = vst [vmem:[%s236] sm:$0x4] %v555
        %vm557 = vcmask 1043459
        %v558 = vsel %vm557, %v509, 0.0
        %559 = vadd.xlane.f32.xlu0 %v558
        %v560 = vpop.xlane.xlu0 %559
        %v561 = vmul.f32 %v560, 0.041666668
        %v562 = vsub.f32 %v509, %v561
        %v563 = vsel %vm240, %v562, 0.0
        %v564 = vmul.f32 %v563, %v563
        %v565 = vsel %vm557, %v564, 0.0
        %566 = vadd.xlane.f32.xlu0 %v565
        %v567 = vpop.xlane.xlu0 %566
        %v568 = vmul.f32 %v567, 0.041666668
        %v569 = vadd.f32 %v568, 1e-05
        %v570 = vrsqrt.pop %v569
        %v571 = vmul.f32 %v563, %v570
        %572 = vst [vmem:[%s236] sm:$0x8] %v571
        %vm573 = vcmask 1044484
        %v574 = vsel %vm573, %v509, 0.0
        %575 = vadd.xlane.f32.xlu0 %v574
        %v576 = vpop.xlane.xlu0 %575
        %v577 = vmul.f32 %v576, 0.041666668
        %v578 = vsub.f32 %v509, %v577
        %v579 = vsel %vm240, %v578, 0.0
        %v580 = vmul.f32 %v579, %v579
        %v581 = vsel %vm573, %v580, 0.0
        %582 = vadd.xlane.f32.xlu0 %v581
        %v583 = vpop.xlane.xlu0 %582
        %v584 = vmul.f32 %v583, 0.041666668
        %v585 = vadd.f32 %v584, 1e-05
        %v586 = vrsqrt.pop %v585
        %v587 = vmul.f32 %v579, %v586
        %588 = vst [vmem:[%s236] sm:$0x10] %v587
        %vm589 = vcmp.ne.f32.partialorder %v254, %v254
        %v590 = vsel %vm589, 0.0, %v254
        %vm591 = vcmp.eq.f32.partialorder %v590, inf
        %v592 = vsel %vm591, 3.4028235e+38, %v590
        %vm593 = vcmp.eq.f32.partialorder %v592, -inf
        %v594 = vsel %vm593, -3.4028235e+38, %v592
        %v595 = vsel %vm240, %v594, 0.0
        %v596 = vsel %vm557, %v595, 0.0
        %597 = vadd.xlane.f32.xlu0 %v596
        %v598 = vpop.xlane.xlu0 %597
        %v599 = vmul.f32 %v598, 0.041666668
        %v600 = vsub.f32 %v595, %v599
        %v601 = vsel %vm240, %v600, 0.0
        %v602 = vmul.f32 %v601, %v601
        %v603 = vsel %vm557, %v602, 0.0
        %604 = vadd.xlane.f32.xlu0 %v603
        %v605 = vpop.xlane.xlu0 %604
        %v606 = vmul.f32 %v605, 0.041666668
        %v607 = vadd.f32 %v606, 1e-05
        %v608 = vrsqrt.pop %v607
        %v609 = vmul.f32 %v601, %v608
        %610 = vst [vmem:[%s236 + $0x2] sm:$0x8] %v609
        %v611 = vand.u32 2147483647, %v254
        %vm612 = vcmp.ne.f32.partialorder %v611, %v611
        %v613 = vsel %vm612, 0.0, %v611
        %vm614 = vcmp.eq.f32.partialorder %v613, inf
        %v615 = vsel %vm614, 3.4028235e+38, %v613
        %vm616 = vcmp.eq.f32.partialorder %v615, -inf
        %v617 = vsel %vm616, -3.4028235e+38, %v615
        %v618 = vsel %vm240, %v617, 0.0
        %v619 = vsel %vm557, %v618, 0.0
        %620 = vadd.xlane.f32.xlu0 %v619
        %v621 = vpop.xlane.xlu0 %620
        %v622 = vmul.f32 %v621, 0.041666668
        %v623 = vsub.f32 %v618, %v622
        %v624 = vsel %vm240, %v623, 0.0
        %v625 = vmul.f32 %v624, %v624
        %v626 = vsel %vm557, %v625, 0.0
        %627 = vadd.xlane.f32.xlu0 %v626
        %v628 = vpop.xlane.xlu0 %627
        %v629 = vmul.f32 %v628, 0.041666668
        %v630 = vadd.f32 %v629, 1e-05
        %v631 = vrsqrt.pop %v630
        %v632 = vmul.f32 %v624, %v631
        %633 = vst [vmem:[%s236 + $0x3] sm:$0x8] %v632
        %vm634 = vcmp.ne.f32.partialorder %v491, %v491
        %v635 = vsel %vm634, 0.0, %v491
        %vm636 = vcmp.eq.f32.partialorder %v635, inf
        %v637 = vsel %vm636, 3.4028235e+38, %v635
        %vm638 = vcmp.eq.f32.partialorder %v637, -inf
        %v639 = vsel %vm638, -3.4028235e+38, %v637
        %v640 = vsel %vm240, %v639, 0.0
        %v641 = vsel %vm525, %v640, 0.0
        %642 = vadd.xlane.f32.xlu0 %v641
        %v643 = vpop.xlane.xlu0 %642
        %v644 = vmul.f32 %v643, 0.041666668
        %v645 = vsub.f32 %v640, %v644
        %v646 = vsel %vm240, %v645, 0.0
        %v647 = vmul.f32 %v646, %v646
        %v648 = vsel %vm525, %v647, 0.0
        %649 = vadd.xlane.f32.xlu0 %v648
        %v650 = vpop.xlane.xlu0 %649
        %v651 = vmul.f32 %v650, 0.041666668
        %v652 = vadd.f32 %v651, 1e-05
        %v653 = vrsqrt.pop %v652
        %v654 = vmul.f32 %v646, %v653
        %655 = vst [vmem:[%s236 + $0x6] sm:$0x2] %v654
        %vm656 = vcmp.ne.f32.partialorder %v496, %v496
        %v657 = vsel %vm656, 0.0, %v496
        %vm658 = vcmp.eq.f32.partialorder %v657, inf
        %v659 = vsel %vm658, 3.4028235e+38, %v657
        %vm660 = vcmp.eq.f32.partialorder %v659, -inf
        %v661 = vsel %vm660, -3.4028235e+38, %v659
        %v662 = vsel %vm240, %v661, 0.0
        %v663 = vsel %vm325, %v662, 0.0
        %664 = vadd.xlane.f32.xlu0 %v663
        %v665 = vpop.xlane.xlu0 %664
        %v666 = vmul.f32 %v665, 0.041666668
        %v667 = vsub.f32 %v662, %v666
        %v668 = vsel %vm240, %v667, 0.0
        %v669 = vmul.f32 %v668, %v668
        %v670 = vsel %vm325, %v669, 0.0
        %671 = vadd.xlane.f32.xlu0 %v670
        %v672 = vpop.xlane.xlu0 %671
        %v673 = vmul.f32 %v672, 0.041666668
        %v674 = vadd.f32 %v673, 1e-05
        %v675 = vrsqrt.pop %v674
        %v676 = vmul.f32 %v668, %v675
        %677 = vst [vmem:[%s236 + $0x8] sm:$0x1] %v676
        %v679 = vrot.slane %v482, 3
        %v681 = vmul.f32 %v430, %v679
        %vm682 = vcmp.ne.f32.partialorder %v681, %v681
        %v683 = vsel %vm682, 0.0, %v681
        %vm684 = vcmp.eq.f32.partialorder %v683, inf
        %v685 = vsel %vm684, 3.4028235e+38, %v683
        %vm686 = vcmp.eq.f32.partialorder %v685, -inf
        %v687 = vsel %vm686, -3.4028235e+38, %v685
        %v688 = vsel %vm240, %v687, 0.0
        %v689 = vsel %vm325, %v688, 0.0
        %690 = vadd.xlane.f32.xlu0 %v689
        %v691 = vpop.xlane.xlu0 %690
        %v692 = vmul.f32 %v691, 0.041666668
        %v693 = vsub.f32 %v688, %v692
        %v694 = vsel %vm240, %v693, 0.0
        %v695 = vmul.f32 %v694, %v694
        %v696 = vsel %vm325, %v695, 0.0
        %697 = vadd.xlane.f32.xlu0 %v696
        %v698 = vpop.xlane.xlu0 %697
        %v699 = vmul.f32 %v698, 0.041666668
        %v700 = vadd.f32 %v699, 1e-05
        %v701 = vrsqrt.pop %v700
        %v702 = vmul.f32 %v694, %v701
        %703 = vst [vmem:[%s236 + $0x9] sm:$0x1] %v702
        %v704 = vrot.slane %v482, 2
        %v706 = vmul.f32 %v430, %v704
        %vm707 = vcmp.ne.f32.partialorder %v706, %v706
        %v708 = vsel %vm707, 0.0, %v706
        %vm709 = vcmp.eq.f32.partialorder %v708, inf
        %v710 = vsel %vm709, 3.4028235e+38, %v708
        %vm711 = vcmp.eq.f32.partialorder %v710, -inf
        %v712 = vsel %vm711, -3.4028235e+38, %v710
        %v713 = vsel %vm240, %v712, 0.0
        %v714 = vsel %vm525, %v713, 0.0
        %715 = vadd.xlane.f32.xlu0 %v714
        %v716 = vpop.xlane.xlu0 %715
        %v717 = vmul.f32 %v716, 0.041666668
        %v718 = vsub.f32 %v713, %v717
        %v719 = vsel %vm240, %v718, 0.0
        %v720 = vmul.f32 %v719, %v719
        %v721 = vsel %vm525, %v720, 0.0
        %722 = vadd.xlane.f32.xlu0 %v721
        %v723 = vpop.xlane.xlu0 %722
        %v724 = vmul.f32 %v723, 0.041666668
        %v725 = vadd.f32 %v724, 1e-05
        %v726 = vrsqrt.pop %v725
        %v727 = vmul.f32 %v719, %v726
        %728 = vst [vmem:[%s236 + $0x9] sm:$0x2] %v727
        %v729 = vrot.slane %v482, 1
        %v731 = vmul.f32 %v430, %v729
        %vm732 = vcmp.ne.f32.partialorder %v731, %v731
        %v733 = vsel %vm732, 0.0, %v731
        %vm734 = vcmp.eq.f32.partialorder %v733, inf
        %v735 = vsel %vm734, 3.4028235e+38, %v733
        %vm736 = vcmp.eq.f32.partialorder %v735, -inf
        %v737 = vsel %vm736, -3.4028235e+38, %v735
        %v738 = vsel %vm240, %v737, 0.0
        %v739 = vsel %vm541, %v738, 0.0
        %740 = vadd.xlane.f32.xlu0 %v739
        %v741 = vpop.xlane.xlu0 %740
        %v742 = vmul.f32 %v741, 0.041666668
        %v743 = vsub.f32 %v738, %v742
        %v744 = vsel %vm240, %v743, 0.0
        %v745 = vmul.f32 %v744, %v744
        %v746 = vsel %vm541, %v745, 0.0
        %747 = vadd.xlane.f32.xlu0 %v746
        %v748 = vpop.xlane.xlu0 %747
        %v749 = vmul.f32 %v748, 0.041666668
        %v750 = vadd.f32 %v749, 1e-05
        %v751 = vrsqrt.pop %v750
        %v752 = vmul.f32 %v744, %v751
        %753 = vst [vmem:[%s236 + $0x9] sm:$0x4] %v752
        %v754 = vmul.f32 %v430, %v482
        %vm755 = vcmp.ne.f32.partialorder %v754, %v754
        %v756 = vsel %vm755, 0.0, %v754
        %vm757 = vcmp.eq.f32.partialorder %v756, inf
        %v758 = vsel %vm757, 3.4028235e+38, %v756
        %vm759 = vcmp.eq.f32.partialorder %v758, -inf
        %v760 = vsel %vm759, -3.4028235e+38, %v758
        %v761 = vsel %vm240, %v760, 0.0
        %v762 = vsel %vm557, %v761, 0.0
        %763 = vadd.xlane.f32.xlu0 %v762
        %v764 = vpop.xlane.xlu0 %763
        %v765 = vmul.f32 %v764, 0.041666668
        %v766 = vsub.f32 %v761, %v765
        %v767 = vsel %vm240, %v766, 0.0
        %v768 = vmul.f32 %v767, %v767
        %v769 = vsel %vm557, %v768, 0.0
        %770 = vadd.xlane.f32.xlu0 %v769
        %v771 = vpop.xlane.xlu0 %770
        %v772 = vmul.f32 %v771, 0.041666668
        %v773 = vadd.f32 %v772, 1e-05
        %v774 = vrsqrt.pop %v773
        %v775 = vmul.f32 %v767, %v774
        %776 = vst [vmem:[%s236 + $0x9] sm:$0x8] %v775
        %v777 = vmul.f32 %v434, %v481
        %vm778 = vcmp.ne.f32.partialorder %v777, %v777
        %v779 = vsel %vm778, 0.0, %v777
        %vm780 = vcmp.eq.f32.partialorder %v779, inf
        %v781 = vsel %vm780, 3.4028235e+38, %v779
        %vm782 = vcmp.eq.f32.partialorder %v781, -inf
        %v783 = vsel %vm782, -3.4028235e+38, %v781
        %v784 = vsel %vm240, %v783, 0.0
        %v785 = vsel %vm573, %v784, 0.0
        %786 = vadd.xlane.f32.xlu0 %v785
        %v787 = vpop.xlane.xlu0 %786
        %v788 = vmul.f32 %v787, 0.041666668
        %v789 = vsub.f32 %v784, %v788
        %v790 = vsel %vm240, %v789, 0.0
        %v791 = vmul.f32 %v790, %v790
        %v792 = vsel %vm573, %v791, 0.0
        %793 = vadd.xlane.f32.xlu0 %v792
        %v794 = vpop.xlane.xlu0 %793
        %v795 = vmul.f32 %v794, 0.041666668
        %v796 = vadd.f32 %v795, 1e-05
        %v797 = vrsqrt.pop %v796
        %v798 = vmul.f32 %v790, %v797
        %799 = vst [vmem:[%s236 + $0x9] sm:$0x10] %v798
        %v800 = vrot.slane %v481, 7
        %v802 = vmul.f32 %v434, %v800
        %vm803 = vcmp.ne.f32.partialorder %v802, %v802
        %v804 = vsel %vm803, 0.0, %v802
        %vm805 = vcmp.eq.f32.partialorder %v804, inf
        %v806 = vsel %vm805, 3.4028235e+38, %v804
        %vm807 = vcmp.eq.f32.partialorder %v806, -inf
        %v808 = vsel %vm807, -3.4028235e+38, %v806
        %v809 = vsel %vm240, %v808, 0.0
        %vm810 = vcmask 1045509
        %v811 = vsel %vm810, %v809, 0.0
        %812 = vadd.xlane.f32.xlu0 %v811
        %v813 = vpop.xlane.xlu0 %812
        %v814 = vmul.f32 %v813, 0.041666668
        %v815 = vsub.f32 %v809, %v814
        %v816 = vsel %vm240, %v815, 0.0
        %v817 = vmul.f32 %v816, %v816
        %v818 = vsel %vm810, %v817, 0.0
        %819 = vadd.xlane.f32.xlu0 %v818
        %v820 = vpop.xlane.xlu0 %819
        %v821 = vmul.f32 %v820, 0.041666668
        %v822 = vadd.f32 %v821, 1e-05
        %v823 = vrsqrt.pop %v822
        %v824 = vmul.f32 %v816, %v823
        %825 = vst [vmem:[%s236 + $0x9] sm:$0x20] %v824
        %v826 = vadd.f32 %v237, 1.0
        %v827 = vlog2.pop %v826
        %v828 = vmul.f32 %v827, 0.6931472
        %v829 = vmul.f32 -0.5, %v237
        %v830 = vadd.f32 %v829, 1.0
        %v831 = vmul.f32 %v830, %v237
        %v832 = vand.u32 2147483647, %v237
        %vm833 = vcmp.lt.f32.partialorder %v832, 0.0004427343
        %v834 = vsel %vm833, %v831, %v828
        %vm835 = vcmp.ne.f32.partialorder %v834, %v834
        %v836 = vsel %vm835, 0.0, %v834
        %vm837 = vcmp.eq.f32.partialorder %v836, inf
        %v838 = vsel %vm837, 3.4028235e+38, %v836
        %vm839 = vcmp.eq.f32.partialorder %v838, -inf
        %v840 = vsel %vm839, -3.4028235e+38, %v838
        %v841 = vsel %vm240, %v840, 0.0
        %v842 = vsel %vm573, %v841, 0.0
        %843 = vadd.xlane.f32.xlu0 %v842
        %v844 = vpop.xlane.xlu0 %843
        %v845 = vmul.f32 %v844, 0.041666668
        %v846 = vsub.f32 %v841, %v845
        %v847 = vsel %vm240, %v846, 0.0
        %v848 = vmul.f32 %v847, %v847
        %v849 = vsel %vm573, %v848, 0.0
        %850 = vadd.xlane.f32.xlu0 %v849
        %v851 = vpop.xlane.xlu0 %850
        %v852 = vmul.f32 %v851, 0.041666668
        %v853 = vadd.f32 %v852, 1e-05
        %v854 = vrsqrt.pop %v853
        %v855 = vmul.f32 %v847, %v854
        %856 = vst [vmem:[%s236 + $0xb] sm:$0x10] %v855
        %v857 = vsel %vm240, %v497, 0.0
        %v858 = vsel %vm325, %v857, 0.0
        %859 = vadd.xlane.f32.xlu0 %v858
        %v860 = vpop.xlane.xlu0 %859
        %v861 = vmul.f32 %v860, 0.041666668
        %v862 = vsub.f32 %v857, %v861
        %v863 = vsel %vm240, %v862, 0.0
        %v864 = vmul.f32 %v863, %v863
        %v865 = vsel %vm325, %v864, 0.0
        %866 = vadd.xlane.f32.xlu0 %v865
        %v867 = vpop.xlane.xlu0 %866
        %v868 = vmul.f32 %v867, 0.041666668
        %v869 = vadd.f32 %v868, 1e-05
        %v870 = vrsqrt.pop %v869
        %v871 = vmul.f32 %v863, %v870
        %872 = vst [vmem:[%s236 + $0x10] sm:$0x1] %v871
        %v873 = vsel %vm240, %v498, 0.0
        %v874 = vsel %vm325, %v873, 0.0
        %875 = vadd.xlane.f32.xlu0 %v874
        %v876 = vpop.xlane.xlu0 %875
        %v877 = vmul.f32 %v876, 0.041666668
        %v878 = vsub.f32 %v873, %v877
        %v879 = vsel %vm240, %v878, 0.0
        %v880 = vmul.f32 %v879, %v879
        %v881 = vsel %vm325, %v880, 0.0
        %882 = vadd.xlane.f32.xlu0 %v881
        %v883 = vpop.xlane.xlu0 %882
        %v884 = vmul.f32 %v883, 0.041666668
        %v885 = vadd.f32 %v884, 1e-05
        %v886 = vrsqrt.pop %v885
        %v887 = vmul.f32 %v879, %v886
        %888 = vst [vmem:[%s236 + $0x11] sm:$0x1] %v887
        %vm889 = vcmp.ne.f32.partialorder %v262, %v262
        %v890 = vsel %vm889, 0.0, %v262
        %vm891 = vcmp.eq.f32.partialorder %v890, inf
        %v892 = vsel %vm891, 3.4028235e+38, %v890
        %vm893 = vcmp.eq.f32.partialorder %v892, -inf
        %v894 = vsel %vm893, -3.4028235e+38, %v892
        %v895 = vsel %vm240, %v894, 0.0
        %v896 = vsel %vm557, %v895, 0.0
        %897 = vadd.xlane.f32.xlu0 %v896
        %v898 = vpop.xlane.xlu0 %897
        %v899 = vmul.f32 %v898, 0.041666668
        %v900 = vsub.f32 %v895, %v899
        %v901 = vsel %vm240, %v900, 0.0
        %v902 = vmul.f32 %v901, %v901
        %v903 = vsel %vm557, %v902, 0.0
        %904 = vadd.xlane.f32.xlu0 %v903
        %v905 = vpop.xlane.xlu0 %904
        %v906 = vmul.f32 %v905, 0.041666668
        %v907 = vadd.f32 %v906, 1e-05
        %v908 = vrsqrt.pop %v907
        %v909 = vmul.f32 %v901, %v908
        %910 = vst [vmem:[%s236 + $0xf] sm:$0x8] %v909
        %vm911 = vcmp.ne.f32.partialorder %v270, %v270
        %v912 = vsel %vm911, 0.0, %v270
        %vm913 = vcmp.eq.f32.partialorder %v912, inf
        %v914 = vsel %vm913, 3.4028235e+38, %v912
        %vm915 = vcmp.eq.f32.partialorder %v914, -inf
        %v916 = vsel %vm915, -3.4028235e+38, %v914
        %v917 = vsel %vm240, %v916, 0.0
        %v918 = vsel %vm557, %v917, 0.0
        %919 = vadd.xlane.f32.xlu0 %v918
        %v920 = vpop.xlane.xlu0 %919
        %v921 = vmul.f32 %v920, 0.041666668
        %v922 = vsub.f32 %v917, %v921
        %v923 = vsel %vm240, %v922, 0.0
        %v924 = vmul.f32 %v923, %v923
        %v925 = vsel %vm557, %v924, 0.0
        %926 = vadd.xlane.f32.xlu0 %v925
        %v927 = vpop.xlane.xlu0 %926
        %v928 = vmul.f32 %v927, 0.041666668
        %v929 = vadd.f32 %v928, 1e-05
        %v930 = vrsqrt.pop %v929
        %v931 = vmul.f32 %v923, %v930
        %932 = vst [vmem:[%s236 + $0x10] sm:$0x8] %v931
        %v934 = vrot.slane %v430, 7
        %v936 = vsub.f32 %v237, %v934
        %v938 = vrot.slane %v484, 7
        %v940 = vmul.f32 %v936, %v938
        %vm941 = vcmp.ne.f32.partialorder %v940, %v940
        %v942 = vsel %vm941, 0.0, %v940
        %vm943 = vcmp.eq.f32.partialorder %v942, inf
        %v944 = vsel %vm943, 3.4028235e+38, %v942
        %vm945 = vcmp.eq.f32.partialorder %v944, -inf
        %v946 = vsel %vm945, -3.4028235e+38, %v944
        %v947 = vsel %vm240, %v946, 0.0
        %v948 = vsel %vm557, %v947, 0.0
        %949 = vadd.xlane.f32.xlu0 %v948
        %v950 = vpop.xlane.xlu0 %949
        %v951 = vmul.f32 %v950, 0.041666668
        %v952 = vsub.f32 %v947, %v951
        %v953 = vsel %vm240, %v952, 0.0
        %v954 = vmul.f32 %v953, %v953
        %v955 = vsel %vm557, %v954, 0.0
        %956 = vadd.xlane.f32.xlu0 %v955
        %v957 = vpop.xlane.xlu0 %956
        %v958 = vmul.f32 %v957, 0.041666668
        %v959 = vadd.f32 %v958, 1e-05
        %v960 = vrsqrt.pop %v959
        %v961 = vmul.f32 %v953, %v960
        %962 = vst [vmem:[%s236 + $0x11] sm:$0x8] %v961
        %vm963 = vcmp.ne.f32.partialorder %v480, %v480
        %v964 = vsel %vm963, 0.0, %v480
        %vm965 = vcmp.eq.f32.partialorder %v964, inf
        %v966 = vsel %vm965, 3.4028235e+38, %v964
        %vm967 = vcmp.eq.f32.partialorder %v966, -inf
        %v968 = vsel %vm967, -3.4028235e+38, %v966
        %v969 = vsel %vm240, %v968, 0.0
        %vm970 = vcmask 1047559
        %v971 = vsel %vm970, %v969, 0.0
        %972 = vadd.xlane.f32.xlu0 %v971
        %v973 = vpop.xlane.xlu0 %972
        %v974 = vmul.f32 %v973, 0.041666668
        %v975 = vsub.f32 %v969, %v974
        %v976 = vsel %vm240, %v975, 0.0
        %v977 = vmul.f32 %v976, %v976
        %v978 = vsel %vm970, %v977, 0.0
        %979 = vadd.xlane.f32.xlu0 %v978
        %v980 = vpop.xlane.xlu0 %979
        %v981 = vmul.f32 %v980, 0.041666668
        %v982 = vadd.f32 %v981, 1e-05
        %v983 = vrsqrt.pop %v982
        %v984 = vmul.f32 %v976, %v983
        %985 = vst [vmem:[%s236 + $0xe] sm:$0x80] %v984
        %v986 = vsel %vm240, %v422, 0.0
        %vm987 = vcmask 1046534
        %v988 = vsel %vm987, %v986, 0.0
        %989 = vadd.xlane.f32.xlu0 %v988
        %v990 = vpop.xlane.xlu0 %989
        %v991 = vmul.f32 %v990, 0.041666668
        %v992 = vsub.f32 %v986, %v991
        %v993 = vsel %vm240, %v992, 0.0
        %v994 = vmul.f32 %v993, %v993
        %v995 = vsel %vm987, %v994, 0.0
        %996 = vadd.xlane.f32.xlu0 %v995
        %v997 = vpop.xlane.xlu0 %996
        %v998 = vmul.f32 %v997, 0.041666668
        %v999 = vadd.f32 %v998, 1e-05
        %v1000 = vrsqrt.pop %v999
        %v1001 = vmul.f32 %v993, %v1000
        %1002 = vst [vmem:[%s236 + $0x10] sm:$0x40] %v1001
        %vm1003 = vcmp.ne.f32.partialorder %v502, %v502
        %v1004 = vsel %vm1003, 0.0, %v502
        %vm1005 = vcmp.eq.f32.partialorder %v1004, inf
        %v1006 = vsel %vm1005, 3.4028235e+38, %v1004
        %vm1007 = vcmp.eq.f32.partialorder %v1006, -inf
        %v1008 = vsel %vm1007, -3.4028235e+38, %v1006
        %v1009 = vsel %vm240, %v1008, 0.0
        %v1010 = vsel %vm557, %v1009, 0.0
        %1011 = vadd.xlane.f32.xlu0 %v1010
        %v1012 = vpop.xlane.xlu0 %1011
        %v1013 = vmul.f32 %v1012, 0.041666668
        %v1014 = vsub.f32 %v1009, %v1013
        %v1015 = vsel %vm240, %v1014, 0.0
        %v1016 = vmul.f32 %v1015, %v1015
        %v1017 = vsel %vm557, %v1016, 0.0
        %1018 = vadd.xlane.f32.xlu0 %v1017
        %v1019 = vpop.xlane.xlu0 %1018
        %v1020 = vmul.f32 %v1019, 0.041666668
        %v1021 = vadd.f32 %v1020, 1e-05
        %v1022 = vrsqrt.pop %v1021
        %v1023 = vmul.f32 %v1015, %v1022
        %1024 = vst [vmem:[%s236 + $0x14] sm:$0x8] %v1023
        %vm1025 = vcmp.ne.f32.partialorder %v507, %v507
        %v1026 = vsel %vm1025, 0.0, %v507
        %vm1027 = vcmp.eq.f32.partialorder %v1026, inf
        %v1028 = vsel %vm1027, 3.4028235e+38, %v1026
        %vm1029 = vcmp.eq.f32.partialorder %v1028, -inf
        %v1030 = vsel %vm1029, -3.4028235e+38, %v1028
        %v1031 = vsel %vm240, %v1030, 0.0
        %v1032 = vsel %vm525, %v1031, 0.0
        %1033 = vadd.xlane.f32.xlu0 %v1032
        %v1034 = vpop.xlane.xlu0 %1033
        %v1035 = vmul.f32 %v1034, 0.041666668
        %v1036 = vsub.f32 %v1031, %v1035
        %v1037 = vsel %vm240, %v1036, 0.0
        %v1038 = vmul.f32 %v1037, %v1037
        %v1039 = vsel %vm525, %v1038, 0.0
        %1040 = vadd.xlane.f32.xlu0 %v1039
        %v1041 = vpop.xlane.xlu0 %1040
        %v1042 = vmul.f32 %v1041, 0.041666668
        %v1043 = vadd.f32 %v1042, 1e-05
        %v1044 = vrsqrt.pop %v1043
        %v1045 = vmul.f32 %v1037, %v1044
        %1046 = vst [vmem:[%s236 + $0x17] sm:$0x2] %v1045
        %p1047 = scmp.lt.s32.totalorder %s17, 1
        %s1048 = scalar_select %p1047, %s17, 1
        %s1049 = smul.addr %s1048, 4
        %s1050 = smul.addr %s1049, 8
        %s1051 = scalar_lea.vmem %s5, %s1050
        // Predicated region
        $region45: #{enhanced_feature_layer.1} parent=39 // pred_check
          %p1052 = pneg %p145
        $region46: #{enhanced_feature_layer.1} parent=39 // pred_check_branch
          %1054 = sbr.rel (%p1052) target = $region48
        $region47: #{enhanced_feature_layer.1} parent=39 // pred_region
          _
        $region48: #{enhanced_feature_layer.1} parent=39 // pred_fallthru
          _
      $region40: #{enhanced_feature_layer.1} parent=5 // pred_fallthru
        _
      %p1055 = scmp.le.s32.totalorder 2, %s12
      // Predicated region
      $region49: #{enhanced_feature_layer.1} parent=5 // pred_check
        %p1056 = pneg %p1055
      $region50: #{enhanced_feature_layer.1} parent=5 // pred_check_branch
        %1058 = sbr.rel (%p1056) target = $region52
      $region51: #{enhanced_feature_layer.1} parent=5 // pred_region
        %s1059 = ssub.s32 %s12, 2
        // Predicated region
        $region53: #{enhanced_feature_layer.1} parent=51 // pred_check
          %p1060 = pneg %p151
        $region54: #{enhanced_feature_layer.1} parent=51 // pred_check_branch
          %1062 = sbr.rel (%p1060) target = $region56
        $region55: #{enhanced_feature_layer.1} parent=51 // pred_region
          %p1063 = scmp.lt.s32.totalorder %s18, 1
          %s1064 = scalar_select %p1063, %s18, 1
          %s1065 = smul.addr %s1064, 4
          %s1066 = smul.addr %s1065, 8
          %s1067 = scalar_lea.vmem %s5, %s1066
        $region56: #{enhanced_feature_layer.1} parent=51 // pred_fallthru
          _
      $region52: #{enhanced_feature_layer.1} parent=5 // pred_fallthru
        _
    $region6: #{enhanced_feature_layer.1} parent=1 // loop_footer
      %s16 = sadd.s32 1, %s12
    $region7: #{enhanced_feature_layer.1} parent=1 // loop_footer_branch
      %11 = sbr.rel target = $region3
    $region8: #{enhanced_feature_layer.1} parent=1 // loop_exit
      _
    %1068 = vsyncpa [#allocation3], 1
    %s1069 = scalar_lea.sflag [#allocation3], 1
    %1070 = vsyncpa %s1069, 1

</llo_original>
